<compile_context>
chip_gen: v7x
topology: tpu7x:2x2x1
jax: 0.10.0
libtpu: 0.0.40
codegen_flags: <defaults>
</compile_context>

<pallas_src>
import functools

import jax
import jax.numpy as jnp
from jax import lax
from jax.experimental import pallas as pl
from jax.experimental.pallas import tpu as pltpu

EPS = 1e-5  # nn.BatchNorm2d default


def _round_up(x, m):
    return (x + m - 1) // m * m


def _pick_row_tile(h, w, target_rows):
    """Largest divisor th of h with th*w <= target_rows and th*w a multiple of 8."""
    divs = [t for t in range(1, h + 1) if h % t == 0]
    ok = [t for t in divs if (t * w) % 8 == 0]
    if not ok:
        return h  # full-extent block is always a legal BlockSpec
    fitting = [t for t in ok if t * w <= target_rows]
    return max(fitting) if fitting else min(ok)


def _conv_relu_stats_kernel(x_ref, w_ref, b_ref, y_ref, psum_ref,
                            *, th, w_out, cin_pad, cout_pad):
    """Pass 1: fused 3x3 conv (as 9 accumulated matmuls) + bias + ReLU + BN partial sums.

    x_ref:    (H+2, W+2, CIN_PAD)   bf16  padded image, resident across row tiles of one image
    w_ref:    (9, CIN_PAD, COUT_PAD) bf16 weight tap p = dy*3 + dx, laid out [ci, co]
    b_ref:    (1, COUT_PAD)          f32
    y_ref:    (TH*W, COUT_PAD)       f32  conv+ReLU rows of this tile (lane-dense)
    psum_ref: (2, COUT_PAD)          f32  [sum; sum of squares] over this tile's rows
    """
    i = pl.program_id(1)
    rs = i * th  # first output row of this tile (padded-input row offset is rs + dy)

    acc = jnp.zeros((th * w_out, cout_pad), jnp.float32)
    for p in range(9):  # static unroll over the 9 taps
        dy, dx = divmod(p, 3)
        xs = x_ref[pl.ds(rs + dy, th), pl.ds(dx, w_out), :]   # (TH, W, CIN_PAD) bf16
        xs = xs.reshape(th * w_out, cin_pad)                  # collapse leading dims (lane dim kept)
        acc = acc + jnp.dot(xs, w_ref[p], preferred_element_type=jnp.float32)

    y = jnp.maximum(acc + b_ref[...], 0.0)                    # bias + ReLU in f32
    y_ref[...] = y
    psum_ref[0:1, :] = jnp.sum(y, axis=0, keepdims=True)
    psum_ref[1:2, :] = jnp.sum(y * y, axis=0, keepdims=True)


def _bn_apply_kernel(y_ref, stats_ref, g_ref, bt_ref, out_ref, *, inv_m):
    """Pass 2: apply BatchNorm2d (training-mode batch stats, biased variance)."""
    s = stats_ref[0:1, :]
    ss = stats_ref[1:2, :]
    mean = s * inv_m
    var = ss * inv_m - mean * mean
    scale = lax.rsqrt(var + EPS) * g_ref[...]
    out_ref[...] = (y_ref[...] - mean) * scale + bt_ref[...]


def conv_block_forward(x, weight, bias, gamma, beta, *, target_tile_rows=512):
    """x: (N, Cin, H, W) f32; weight: (Cout, Cin, 3, 3); bias/gamma/beta: (Cout,). Returns NCHW f32."""
    n, cin, h, w = x.shape
    cout, _, kh, kw = weight.shape
    assert (kh, kw) == (3, 3)

    cin_pad = _round_up(cin, 8)       # sublane-friendly contraction depth
    cout_pad = _round_up(cout, 128)   # lane-dense output channels (unmasked stores, full MXU N)
    th = _pick_row_tile(h, w, target_tile_rows)
    hc = h // th
    tile_rows = th * w
    hw = h * w
    hp, wp = h + 2, w + 2

    # ---- layout plumbing only (no im2col blow-up): NCHW -> padded NHWC, bf16 ----
    x_nhwc = jnp.transpose(x, (0, 2, 3, 1)).astype(jnp.float32)
    x_pad = jnp.pad(x_nhwc, ((0, 0), (1, 1), (1, 1), (0, cin_pad - cin)))
    x_pad = x_pad.astype(jnp.bfloat16)                                   # (N, H+2, W+2, CIN_PAD)

    w_taps = jnp.transpose(weight, (2, 3, 1, 0)).reshape(kh * kw, cin, cout)
    w9 = jnp.pad(w_taps.astype(jnp.bfloat16),
                 ((0, 0), (0, cin_pad - cin), (0, cout_pad - cout)))     # (9, CIN_PAD, COUT_PAD)

    def pad_row(v):
        return jnp.pad(v.astype(jnp.float32).reshape(1, cout), ((0, 0), (0, cout_pad - cout)))

    b_row, g_row, bt_row = pad_row(bias), pad_row(gamma), pad_row(beta)

    # ---- pass 1: conv + bias + ReLU, plus per-tile BN partial sums ----
    conv_kernel = functools.partial(
        _conv_relu_stats_kernel, th=th, w_out=w, cin_pad=cin_pad, cout_pad=cout_pad)

    y_flat, partials = pl.pallas_call(
        conv_kernel,
        out_shape=(
            jax.ShapeDtypeStruct((n, hw, cout_pad), jnp.float32),
            jax.ShapeDtypeStruct((n, hc, 2, cout_pad), jnp.float32),
        ),
        grid=(n, hc),
        in_specs=[
            # Whole padded image; block index only changes with b -> DMA'd once per image.
            pl.BlockSpec((None, hp, wp, cin_pad), lambda b, i: (b, 0, 0, 0)),
            pl.BlockSpec((kh * kw, cin_pad, cout_pad), lambda b, i: (0, 0, 0)),
            pl.BlockSpec((1, cout_pad), lambda b, i: (0, 0)),
        ],
        out_specs=(
            pl.BlockSpec((None, tile_rows, cout_pad), lambda b, i: (b, i, 0)),
            pl.BlockSpec((None, None, 2, cout_pad), lambda b, i: (b, i, 0, 0)),
        ),
        compiler_params=pltpu.CompilerParams(
            dimension_semantics=("parallel", "parallel")),
    )(x_pad, w9, b_row)

    # Tiny cross-tile reduction of the BN partials (O(N*Hc*2*COUT_PAD) glue).
    stats = jnp.sum(partials, axis=(0, 1))                               # (2, COUT_PAD)

    # ---- pass 2: normalize (training-mode BatchNorm2d, biased variance) ----
    bn_kernel = functools.partial(_bn_apply_kernel, inv_m=1.0 / float(n * hw))
    out_flat = pl.pallas_call(
        bn_kernel,
        out_shape=jax.ShapeDtypeStruct((n, hw, cout_pad), jnp.float32),
        grid=(n, hc),
        in_specs=[
            pl.BlockSpec((None, tile_rows, cout_pad), lambda b, i: (b, i, 0)),
            pl.BlockSpec((2, cout_pad), lambda b, i: (0, 0)),
            pl.BlockSpec((1, cout_pad), lambda b, i: (0, 0)),
            pl.BlockSpec((1, cout_pad), lambda b, i: (0, 0)),
        ],
        out_specs=pl.BlockSpec((None, tile_rows, cout_pad), lambda b, i: (b, i, 0)),
        compiler_params=pltpu.CompilerParams(
            dimension_semantics=("parallel", "parallel")),
    )(y_flat, stats, g_row, bt_row)

    out = out_flat[:, :, :cout].reshape(n, h, w, cout)
    return jnp.transpose(out, (0, 3, 1, 2))


def reference_forward(x, weight, bias, gamma, beta):
    """Pure-JAX reference mirroring the PyTorch module (training-mode BN).

    Inputs are rounded to bf16 before the conv to mirror the kernel's bf16 MXU operands
    (accumulation is f32 in both), so the comparison isolates structural correctness.
    """
    cout = weight.shape[0]
    xb = x.astype(jnp.bfloat16).astype(jnp.float32)
    wb = weight.astype(jnp.bfloat16).astype(jnp.float32)
    y = lax.conv_general_dilated(
        xb, wb, window_strides=(1, 1), padding=((1, 1), (1, 1)),
        dimension_numbers=("NCHW", "OIHW", "NCHW"),
    ) + bias.reshape(1, cout, 1, 1)
    y = jnp.maximum(y, 0.0)
    mean = jnp.mean(y, axis=(0, 2, 3), keepdims=True)
    var = jnp.mean((y - mean) ** 2, axis=(0, 2, 3), keepdims=True)
    return (y - mean) * lax.rsqrt(var + EPS) * gamma.reshape(1, cout, 1, 1) \
        + beta.reshape(1, cout, 1, 1)


if __name__ == "__main__":
    key = jax.random.PRNGKey(0)
    k_x, k_w, k_b = jax.random.split(key, 3)

    N, Cin, H, W = 2, 4, 16, 16
    Cout = 8

    x = jax.random.normal(k_x, (N, Cin, H, W), dtype=jnp.float32)
    weight = jax.random.normal(k_w, (Cout, Cin, 3, 3), dtype=jnp.float32) * 0.1
    bias = jax.random.normal(k_b, (Cout,), dtype=jnp.float32) * 0.1
    gamma = jnp.ones((Cout,), dtype=jnp.float32)   # BatchNorm2d weight init
    beta = jnp.zeros((Cout,), dtype=jnp.float32)   # BatchNorm2d bias init

    # TODO(synk): BatchNorm2d running_mean/running_var buffer updates (training side effect)
    # are not modeled; only the forward output is produced.

    # Small tile target so the toy shape exercises multiple row tiles per image;
    # production sizes should use the default 512(+) rows per tile.
    out = conv_block_forward(x, weight, bias, gamma, beta, target_tile_rows=128)
    out = jax.block_until_ready(out)

    ref = reference_forward(x, weight, bias, gamma, beta)
    assert out.shape == (N, Cout, H, W)
    max_err = float(jnp.max(jnp.abs(out - ref)))
    assert jnp.allclose(out, ref, atol=2e-3, rtol=2e-3), f"mismatch vs reference (max abs err {max_err})"

    print("KERNEL_OK")
</pallas_src>

<mosaic_0001>
module attributes {stable_mosaic.version = 11 : i64} {
  func.func @_conv_relu_stats_kernel(%arg0: i32, %arg1: i32, %arg2: memref<1x18x18x8xbf16, #tpu.memory_space<vmem>>, %arg3: memref<9x8x128xbf16, #tpu.memory_space<vmem>>, %arg4: memref<1x128xf32, #tpu.memory_space<vmem>>, %arg5: memref<1x128x128xf32, #tpu.memory_space<vmem>>, %arg6: memref<1x1x2x128xf32, #tpu.memory_space<vmem>>) attributes {dimension_semantics = [#tpu.dimension_semantics<parallel>, #tpu.dimension_semantics<parallel>], iteration_bounds = array<i64: 2, 2>, scalar_prefetch = 0 : i64, scratch_operands = 0 : i64, tpu.core_type = #tpu.core_type<tc>, window_params = [{transform_indices = @transform_0, window_bounds = array<i64: 1, 18, 18, 8>}, {pipeline_mode = #tpu.pipeline_mode<synchronous>, transform_indices = @transform_1, window_bounds = array<i64: 9, 8, 128>}, {pipeline_mode = #tpu.pipeline_mode<synchronous>, transform_indices = @transform_2, window_bounds = array<i64: 1, 128>}, {transform_indices = @transform_3, window_bounds = array<i64: 1, 128, 128>}, {transform_indices = @transform_4, window_bounds = array<i64: 1, 1, 2, 128>}]} {
    %c8_i32 = arith.constant 8 : i32
    %0 = arith.muli %arg1, %c8_i32 : i32
    %cst = arith.constant 0.000000e+00 : f32
    %1 = vector.broadcast %cst : f32 to vector<128x128xf32>
    %c0_i32 = arith.constant 0 : i32
    %2 = arith.addi %0, %c0_i32 : i32
    %c0 = arith.constant 0 : index
    %3 = arith.index_cast %2 : i32 to index
    %c0_0 = arith.constant 0 : index
    %c0_1 = arith.constant 0 : index
    %4 = vector.load %arg2[%c0, %3, %c0_0, %c0_1] : memref<1x18x18x8xbf16, #tpu.memory_space<vmem>>, vector<1x8x16x8xbf16>
    %5 = vector.shape_cast %4 : vector<1x8x16x8xbf16> to vector<8x16x8xbf16>
    %6 = vector.shape_cast %5 : vector<8x16x8xbf16> to vector<128x8xbf16>
    %c0_2 = arith.constant 0 : index
    %c0_3 = arith.constant 0 : index
    %c0_4 = arith.constant 0 : index
    %7 = vector.load %arg3[%c0_2, %c0_3, %c0_4] : memref<9x8x128xbf16, #tpu.memory_space<vmem>>, vector<1x8x128xbf16>
    %8 = vector.shape_cast %7 : vector<1x8x128xbf16> to vector<8x128xbf16>
    %cst_5 = arith.constant dense<0.000000e+00> : vector<128x128xf32>
    %9 = tpu.matmul %6, %8, %cst_5 {dimension_numbers = #tpu.dot_dimension_numbers<[1], [0], [0], [1], [0, 0, 1, 1], [], []>} : vector<128x8xbf16>, vector<8x128xbf16>, vector<128x128xf32> -> vector<128x128xf32>
    %10 = arith.addf %1, %9 : vector<128x128xf32>
    %c0_i32_6 = arith.constant 0 : i32
    %11 = arith.addi %0, %c0_i32_6 : i32
    %c0_7 = arith.constant 0 : index
    %12 = arith.index_cast %11 : i32 to index
    %c1 = arith.constant 1 : index
    %c0_8 = arith.constant 0 : index
    %13 = vector.load %arg2[%c0_7, %12, %c1, %c0_8] : memref<1x18x18x8xbf16, #tpu.memory_space<vmem>>, vector<1x8x16x8xbf16>
    %14 = vector.shape_cast %13 : vector<1x8x16x8xbf16> to vector<8x16x8xbf16>
    %15 = vector.shape_cast %14 : vector<8x16x8xbf16> to vector<128x8xbf16>
    %c1_9 = arith.constant 1 : index
    %c0_10 = arith.constant 0 : index
    %c0_11 = arith.constant 0 : index
    %16 = vector.load %arg3[%c1_9, %c0_10, %c0_11] : memref<9x8x128xbf16, #tpu.memory_space<vmem>>, vector<1x8x128xbf16>
    %17 = vector.shape_cast %16 : vector<1x8x128xbf16> to vector<8x128xbf16>
    %cst_12 = arith.constant dense<0.000000e+00> : vector<128x128xf32>
    %18 = tpu.matmul %15, %17, %cst_12 {dimension_numbers = #tpu.dot_dimension_numbers<[1], [0], [0], [1], [0, 0, 1, 1], [], []>} : vector<128x8xbf16>, vector<8x128xbf16>, vector<128x128xf32> -> vector<128x128xf32>
    %19 = arith.addf %10, %18 : vector<128x128xf32>
    %c0_i32_13 = arith.constant 0 : i32
    %20 = arith.addi %0, %c0_i32_13 : i32
    %c0_14 = arith.constant 0 : index
    %21 = arith.index_cast %20 : i32 to index
    %c2 = arith.constant 2 : index
    %c0_15 = arith.constant 0 : index
    %22 = vector.load %arg2[%c0_14, %21, %c2, %c0_15] : memref<1x18x18x8xbf16, #tpu.memory_space<vmem>>, vector<1x8x16x8xbf16>
    %23 = vector.shape_cast %22 : vector<1x8x16x8xbf16> to vector<8x16x8xbf16>
    %24 = vector.shape_cast %23 : vector<8x16x8xbf16> to vector<128x8xbf16>
    %c2_16 = arith.constant 2 : index
    %c0_17 = arith.constant 0 : index
    %c0_18 = arith.constant 0 : index
    %25 = vector.load %arg3[%c2_16, %c0_17, %c0_18] : memref<9x8x128xbf16, #tpu.memory_space<vmem>>, vector<1x8x128xbf16>
    %26 = vector.shape_cast %25 : vector<1x8x128xbf16> to vector<8x128xbf16>
    %cst_19 = arith.constant dense<0.000000e+00> : vector<128x128xf32>
    %27 = tpu.matmul %24, %26, %cst_19 {dimension_numbers = #tpu.dot_dimension_numbers<[1], [0], [0], [1], [0, 0, 1, 1], [], []>} : vector<128x8xbf16>, vector<8x128xbf16>, vector<128x128xf32> -> vector<128x128xf32>
    %28 = arith.addf %19, %27 : vector<128x128xf32>
    %c1_i32 = arith.constant 1 : i32
    %29 = arith.addi %0, %c1_i32 : i32
    %c0_20 = arith.constant 0 : index
    %30 = arith.index_cast %29 : i32 to index
    %c0_21 = arith.constant 0 : index
    %c0_22 = arith.constant 0 : index
    %31 = vector.load %arg2[%c0_20, %30, %c0_21, %c0_22] : memref<1x18x18x8xbf16, #tpu.memory_space<vmem>>, vector<1x8x16x8xbf16>
    %32 = vector.shape_cast %31 : vector<1x8x16x8xbf16> to vector<8x16x8xbf16>
    %33 = vector.shape_cast %32 : vector<8x16x8xbf16> to vector<128x8xbf16>
    %c3 = arith.constant 3 : index
    %c0_23 = arith.constant 0 : index
    %c0_24 = arith.constant 0 : index
    %34 = vector.load %arg3[%c3, %c0_23, %c0_24] : memref<9x8x128xbf16, #tpu.memory_space<vmem>>, vector<1x8x128xbf16>
    %35 = vector.shape_cast %34 : vector<1x8x128xbf16> to vector<8x128xbf16>
    %cst_25 = arith.constant dense<0.000000e+00> : vector<128x128xf32>
    %36 = tpu.matmul %33, %35, %cst_25 {dimension_numbers = #tpu.dot_dimension_numbers<[1], [0], [0], [1], [0, 0, 1, 1], [], []>} : vector<128x8xbf16>, vector<8x128xbf16>, vector<128x128xf32> -> vector<128x128xf32>
    %37 = arith.addf %28, %36 : vector<128x128xf32>
    %c1_i32_26 = arith.constant 1 : i32
    %38 = arith.addi %0, %c1_i32_26 : i32
    %c0_27 = arith.constant 0 : index
    %39 = arith.index_cast %38 : i32 to index
    %c1_28 = arith.constant 1 : index
    %c0_29 = arith.constant 0 : index
    %40 = vector.load %arg2[%c0_27, %39, %c1_28, %c0_29] : memref<1x18x18x8xbf16, #tpu.memory_space<vmem>>, vector<1x8x16x8xbf16>
    %41 = vector.shape_cast %40 : vector<1x8x16x8xbf16> to vector<8x16x8xbf16>
    %42 = vector.shape_cast %41 : vector<8x16x8xbf16> to vector<128x8xbf16>
    %c4 = arith.constant 4 : index
    %c0_30 = arith.constant 0 : index
    %c0_31 = arith.constant 0 : index
    %43 = vector.load %arg3[%c4, %c0_30, %c0_31] : memref<9x8x128xbf16, #tpu.memory_space<vmem>>, vector<1x8x128xbf16>
    %44 = vector.shape_cast %43 : vector<1x8x128xbf16> to vector<8x128xbf16>
    %cst_32 = arith.constant dense<0.000000e+00> : vector<128x128xf32>
    %45 = tpu.matmul %42, %44, %cst_32 {dimension_numbers = #tpu.dot_dimension_numbers<[1], [0], [0], [1], [0, 0, 1, 1], [], []>} : vector<128x8xbf16>, vector<8x128xbf16>, vector<128x128xf32> -> vector<128x128xf32>
    %46 = arith.addf %37, %45 : vector<128x128xf32>
    %c1_i32_33 = arith.constant 1 : i32
    %47 = arith.addi %0, %c1_i32_33 : i32
    %c0_34 = arith.constant 0 : index
    %48 = arith.index_cast %47 : i32 to index
    %c2_35 = arith.constant 2 : index
    %c0_36 = arith.constant 0 : index
    %49 = vector.load %arg2[%c0_34, %48, %c2_35, %c0_36] : memref<1x18x18x8xbf16, #tpu.memory_space<vmem>>, vector<1x8x16x8xbf16>
    %50 = vector.shape_cast %49 : vector<1x8x16x8xbf16> to vector<8x16x8xbf16>
    %51 = vector.shape_cast %50 : vector<8x16x8xbf16> to vector<128x8xbf16>
    %c5 = arith.constant 5 : index
    %c0_37 = arith.constant 0 : index
    %c0_38 = arith.constant 0 : index
    %52 = vector.load %arg3[%c5, %c0_37, %c0_38] : memref<9x8x128xbf16, #tpu.memory_space<vmem>>, vector<1x8x128xbf16>
    %53 = vector.shape_cast %52 : vector<1x8x128xbf16> to vector<8x128xbf16>
    %cst_39 = arith.constant dense<0.000000e+00> : vector<128x128xf32>
    %54 = tpu.matmul %51, %53, %cst_39 {dimension_numbers = #tpu.dot_dimension_numbers<[1], [0], [0], [1], [0, 0, 1, 1], [], []>} : vector<128x8xbf16>, vector<8x128xbf16>, vector<128x128xf32> -> vector<128x128xf32>
    %55 = arith.addf %46, %54 : vector<128x128xf32>
    %c2_i32 = arith.constant 2 : i32
    %56 = arith.addi %0, %c2_i32 : i32
    %c0_40 = arith.constant 0 : index
    %57 = arith.index_cast %56 : i32 to index
    %c0_41 = arith.constant 0 : index
    %c0_42 = arith.constant 0 : index
    %58 = vector.load %arg2[%c0_40, %57, %c0_41, %c0_42] : memref<1x18x18x8xbf16, #tpu.memory_space<vmem>>, vector<1x8x16x8xbf16>
    %59 = vector.shape_cast %58 : vector<1x8x16x8xbf16> to vector<8x16x8xbf16>
    %60 = vector.shape_cast %59 : vector<8x16x8xbf16> to vector<128x8xbf16>
    %c6 = arith.constant 6 : index
    %c0_43 = arith.constant 0 : index
    %c0_44 = arith.constant 0 : index
    %61 = vector.load %arg3[%c6, %c0_43, %c0_44] : memref<9x8x128xbf16, #tpu.memory_space<vmem>>, vector<1x8x128xbf16>
    %62 = vector.shape_cast %61 : vector<1x8x128xbf16> to vector<8x128xbf16>
    %cst_45 = arith.constant dense<0.000000e+00> : vector<128x128xf32>
    %63 = tpu.matmul %60, %62, %cst_45 {dimension_numbers = #tpu.dot_dimension_numbers<[1], [0], [0], [1], [0, 0, 1, 1], [], []>} : vector<128x8xbf16>, vector<8x128xbf16>, vector<128x128xf32> -> vector<128x128xf32>
    %64 = arith.addf %55, %63 : vector<128x128xf32>
    %c2_i32_46 = arith.constant 2 : i32
    %65 = arith.addi %0, %c2_i32_46 : i32
    %c0_47 = arith.constant 0 : index
    %66 = arith.index_cast %65 : i32 to index
    %c1_48 = arith.constant 1 : index
    %c0_49 = arith.constant 0 : index
    %67 = vector.load %arg2[%c0_47, %66, %c1_48, %c0_49] : memref<1x18x18x8xbf16, #tpu.memory_space<vmem>>, vector<1x8x16x8xbf16>
    %68 = vector.shape_cast %67 : vector<1x8x16x8xbf16> to vector<8x16x8xbf16>
    %69 = vector.shape_cast %68 : vector<8x16x8xbf16> to vector<128x8xbf16>
    %c7 = arith.constant 7 : index
    %c0_50 = arith.constant 0 : index
    %c0_51 = arith.constant 0 : index
    %70 = vector.load %arg3[%c7, %c0_50, %c0_51] : memref<9x8x128xbf16, #tpu.memory_space<vmem>>, vector<1x8x128xbf16>
    %71 = vector.shape_cast %70 : vector<1x8x128xbf16> to vector<8x128xbf16>
    %cst_52 = arith.constant dense<0.000000e+00> : vector<128x128xf32>
    %72 = tpu.matmul %69, %71, %cst_52 {dimension_numbers = #tpu.dot_dimension_numbers<[1], [0], [0], [1], [0, 0, 1, 1], [], []>} : vector<128x8xbf16>, vector<8x128xbf16>, vector<128x128xf32> -> vector<128x128xf32>
    %73 = arith.addf %64, %72 : vector<128x128xf32>
    %c2_i32_53 = arith.constant 2 : i32
    %74 = arith.addi %0, %c2_i32_53 : i32
    %c0_54 = arith.constant 0 : index
    %75 = arith.index_cast %74 : i32 to index
    %c2_55 = arith.constant 2 : index
    %c0_56 = arith.constant 0 : index
    %76 = vector.load %arg2[%c0_54, %75, %c2_55, %c0_56] : memref<1x18x18x8xbf16, #tpu.memory_space<vmem>>, vector<1x8x16x8xbf16>
    %77 = vector.shape_cast %76 : vector<1x8x16x8xbf16> to vector<8x16x8xbf16>
    %78 = vector.shape_cast %77 : vector<8x16x8xbf16> to vector<128x8xbf16>
    %c8 = arith.constant 8 : index
    %c0_57 = arith.constant 0 : index
    %c0_58 = arith.constant 0 : index
    %79 = vector.load %arg3[%c8, %c0_57, %c0_58] : memref<9x8x128xbf16, #tpu.memory_space<vmem>>, vector<1x8x128xbf16>
    %80 = vector.shape_cast %79 : vector<1x8x128xbf16> to vector<8x128xbf16>
    %cst_59 = arith.constant dense<0.000000e+00> : vector<128x128xf32>
    %81 = tpu.matmul %78, %80, %cst_59 {dimension_numbers = #tpu.dot_dimension_numbers<[1], [0], [0], [1], [0, 0, 1, 1], [], []>} : vector<128x8xbf16>, vector<8x128xbf16>, vector<128x128xf32> -> vector<128x128xf32>
    %82 = arith.addf %73, %81 : vector<128x128xf32>
    %c0_60 = arith.constant 0 : index
    %c0_61 = arith.constant 0 : index
    %83 = vector.load %arg4[%c0_60, %c0_61] : memref<1x128xf32, #tpu.memory_space<vmem>>, vector<1x128xf32>
    %84 = vector.broadcast %83 : vector<1x128xf32> to vector<128x128xf32>
    %85 = arith.addf %82, %84 : vector<128x128xf32>
    %cst_62 = arith.constant 0.000000e+00 : f32
    %86 = vector.broadcast %cst_62 : f32 to vector<128x128xf32>
    %87 = arith.maximumf %85, %86 : vector<128x128xf32>
    %c0_63 = arith.constant 0 : index
    %c0_64 = arith.constant 0 : index
    %c0_65 = arith.constant 0 : index
    %88 = vector.load %arg5[%c0_63, %c0_64, %c0_65] : memref<1x128x128xf32, #tpu.memory_space<vmem>>, vector<1x128x128xf32>
    %89 = vector.shape_cast %88 : vector<1x128x128xf32> to vector<128x128xf32>
    %90 = vector.shape_cast %87 : vector<128x128xf32> to vector<1x128x128xf32>
    tpu.vector_store %arg5[%c0_63, %c0_64, %c0_65], %90 {strides = array<i32>} : memref<1x128x128xf32, #tpu.memory_space<vmem>>, vector<1x128x128xf32>,
    %cst_66 = arith.constant dense<0.000000e+00> : vector<128xf32>
    %91 = vector.multi_reduction <add>, %87, %cst_66 [0] : vector<128x128xf32> to vector<128xf32>
    %92 = vector.shape_cast %91 : vector<128xf32> to vector<1x128xf32>
    %c0_67 = arith.constant 0 : index
    %c0_68 = arith.constant 0 : index
    %c0_69 = arith.constant 0 : index
    %c0_70 = arith.constant 0 : index
    %93 = vector.load %arg6[%c0_67, %c0_68, %c0_69, %c0_70] : memref<1x1x2x128xf32, #tpu.memory_space<vmem>>, vector<1x1x1x128xf32>
    %94 = vector.shape_cast %93 : vector<1x1x1x128xf32> to vector<1x128xf32>
    %95 = vector.shape_cast %92 : vector<1x128xf32> to vector<1x1x1x128xf32>
    tpu.vector_store %arg6[%c0_67, %c0_68, %c0_69, %c0_70], %95 {strides = array<i32>} : memref<1x1x2x128xf32, #tpu.memory_space<vmem>>, vector<1x1x1x128xf32>,
    %96 = arith.mulf %87, %87 : vector<128x128xf32>
    %cst_71 = arith.constant dense<0.000000e+00> : vector<128xf32>
    %97 = vector.multi_reduction <add>, %96, %cst_71 [0] : vector<128x128xf32> to vector<128xf32>
    %98 = vector.shape_cast %97 : vector<128xf32> to vector<1x128xf32>
    %c0_72 = arith.constant 0 : index
    %c0_73 = arith.constant 0 : index
    %c1_74 = arith.constant 1 : index
    %c0_75 = arith.constant 0 : index
    %99 = vector.load %arg6[%c0_72, %c0_73, %c1_74, %c0_75] : memref<1x1x2x128xf32, #tpu.memory_space<vmem>>, vector<1x1x1x128xf32>
    %100 = vector.shape_cast %99 : vector<1x1x1x128xf32> to vector<1x128xf32>
    %101 = vector.shape_cast %98 : vector<1x128xf32> to vector<1x1x1x128xf32>
    tpu.vector_store %arg6[%c0_72, %c0_73, %c1_74, %c0_75], %101 {strides = array<i32>} : memref<1x1x2x128xf32, #tpu.memory_space<vmem>>, vector<1x1x1x128xf32>,
    return
  }
  func.func @transform_0(%arg0: i32, %arg1: i32) -> (i32, i32, i32, i32) {
    %c0_i32 = arith.constant 0 : i32
    %c0_i32_0 = arith.constant 0 : i32
    %c0_i32_1 = arith.constant 0 : i32
    %c0_i32_2 = arith.constant 0 : i32
    return %arg0, %c0_i32, %c0_i32_0, %c0_i32_1 : i32, i32, i32, i32
  }
  func.func @transform_1(%arg0: i32, %arg1: i32) -> (i32, i32, i32) {
    %c0_i32 = arith.constant 0 : i32
    %c0_i32_0 = arith.constant 0 : i32
    %c0_i32_1 = arith.constant 0 : i32
    %c0_i32_2 = arith.constant 0 : i32
    return %c0_i32, %c0_i32_0, %c0_i32_1 : i32, i32, i32
  }
  func.func @transform_2(%arg0: i32, %arg1: i32) -> (i32, i32) {
    %c0_i32 = arith.constant 0 : i32
    %c0_i32_0 = arith.constant 0 : i32
    %c0_i32_1 = arith.constant 0 : i32
    return %c0_i32, %c0_i32_0 : i32, i32
  }
  func.func @transform_3(%arg0: i32, %arg1: i32) -> (i32, i32, i32) {
    %c0_i32 = arith.constant 0 : i32
    %c0_i32_0 = arith.constant 0 : i32
    return %arg0, %arg1, %c0_i32 : i32, i32, i32
  }
  func.func @transform_4(%arg0: i32, %arg1: i32) -> (i32, i32, i32, i32) {
    %c0_i32 = arith.constant 0 : i32
    %c0_i32_0 = arith.constant 0 : i32
    %c0_i32_1 = arith.constant 0 : i32
    return %arg0, %arg1, %c0_i32, %c0_i32_0 : i32, i32, i32, i32
  }
}

</mosaic_0001>

<llo_original>
// kernel: tpu_custom_call.1
$region0: #{tpu_custom_call.1}
  #allocation0 [shape = 'u32[]', space=smem, size = 0x4, offset = 0x4, fixed_abs, tag = 'smem constant byte address 0x4 - core index']
  #allocation1 [shape = 'u32[144,128]{1,0:T(1,128)}', space=vmem, size = 0x12000, scoped, tag = 'internal scratch']
  %s0 = inlined_call_operand.vmem [shape: bf16[2,18,18,8], index: 0, kind: input, shape index: {}]
  %s1 = inlined_call_operand.vmem [shape: bf16[9,8,128], index: 1, kind: input, shape index: {}]
  %s2 = inlined_call_operand.vmem [shape: f32[1,128], index: 2, kind: input, shape index: {}]
  %s3 = inlined_call_operand.hbm [shape: f32[2,256,128], index: 3, kind: output, shape index: {0}]
  %s4 = inlined_call_operand.hbm [shape: f32[2,2,2,128], index: 4, kind: output, shape index: {1}]
  %5 = xla_tuple %s3, %s4
  %s6 = sld [smem:[#allocation0]]
  $region53: #{tpu_custom_call.1} parent=0
    _
  %s8 = ssub.s32 1, %s6
  %s9 = scalar_select 0, %s8, %s6
  $region1: #{tpu_custom_call.1} parent=0
    #allocation2 [shape = 'u8[131072]{0}', space=vmem, size = 0x20000, scoped, tag = 'output window, operand 0']
    #allocation3 [shape = 's32[2]{0}', space=sflag, size = 0x8, scoped, tag = 'scoped memory for tpu_custom_call.1']
    #allocation4 [shape = 'u8[2048]{0}', space=vmem, size = 0x800, scoped, tag = 'output window, operand 1']
    #allocation5 [shape = 's32[2]{0}', space=sflag, size = 0x8, scoped, tag = 'scoped memory for tpu_custom_call.1']
    %10 = vsyncpa [#allocation3], 0
    %s11 = scalar_lea.sflag [#allocation3], 1
    %12 = vsyncpa %s11, 0
    %13 = vsyncpa [#allocation5], 0
    %s14 = scalar_lea.sflag [#allocation5], 1
    %15 = vsyncpa %s14, 0
    loop: start=0, step=1, limit=6
    $region2: #{tpu_custom_call.1} parent=1 // loop_pre_header
      _
    $region3: #{tpu_custom_call.1} parent=1 // loop_header
      %s17 = sphi 0, %s21
      %p18 = scmp.ge.s32.totalorder %s17, 6
      %s24 = sphi 0, %s36
      %s25 = sphi 0, %s32
      %s26 = sphi 0, %s24
      %s27 = sphi 0, %s25
      %s28 = sphi 0, %s26
      %s29 = sphi 0, %s27
      %s39 = sphi 0, %s41
      %s42 = sphi 0, %s39
      %s43 = sphi 0, %s42
      %s59 = sphi 0, %s43
      %s63 = sphi 0, %s63
      %s65 = sphi 0, %s63
      %s66 = sphi 0, %s65
      %s80 = sphi 0, %s66
      %s84 = sphi 0, %s84
      %s86 = sphi 0, %s84
      %s87 = sphi 0, %s86
      %s101 = sphi 0, %s87
      %s109 = sphi 0, %s111
      %s112 = sphi 0, %s109
      %s113 = sphi 0, %s112
      %s129 = sphi 0, %s113
      %s137 = sphi 0, %s139
      %s140 = sphi 0, %s137
      %s141 = sphi 0, %s140
      %s157 = sphi 0, %s141
    $region4: #{tpu_custom_call.1} parent=1 // loop_header_branch
      %20 = sbr.rel (%p18) target = $region8
    $region5: #{tpu_custom_call.1} parent=1 // loop_body
      %s22 = ssub.s32 %s17, 1
      %s23 = ssub.s32 %s17, 2
      %s30 = sadd.s32 1, %s25
      %p31 = scmp.ge.s32.totalorder %s30, 2
      %s32 = scalar_select %p31, 0, %s30
      %s33 = sadd.s32 1, %s24
      %s34 = scalar_select %p31, %s33, %s24
      %p35 = scmp.ge.s32.totalorder %s34, 2
      %s36 = scalar_select %p35, 0, %s34
      %s37 = ssub.s32 %s24, %s36
      %p38 = scmp.eq.s32.totalorder %s37, 0
      %s40 = sadd.s32 %s39, 1
      %s41 = scalar_select %p38, %s39, %s40
      %p44 = pneg %p38
      %p45 = scmp.eq.s32.totalorder %s17, 3
      %p46 = por %p44, %p45
      %p47 = scmp.ne.s32.totalorder %s39, %s42
      %p48 = scmp.eq.s32.totalorder %s17, 0
      %p49 = por %p47, %p48
      %p50 = scmp.ne.s32.totalorder %s39, %s42
      %p51 = scmp.eq.s32.totalorder %s22, 3
      %p52 = por %p50, %p51
      %p53 = scmp.ne.s32.totalorder %s42, %s43
      %p54 = scmp.eq.s32.totalorder %s22, 0
      %p55 = por %p53, %p54
      %p56 = scmp.ne.s32.totalorder %s42, %s43
      %p57 = scmp.eq.s32.totalorder %s23, 3
      %p58 = por %p56, %p57
      %p60 = scmp.ne.s32.totalorder %s43, %s59
      %p61 = scmp.eq.s32.totalorder %s23, 0
      %p62 = por %p60, %p61
      %s64 = sadd.s32 %s63, 1
      %p67 = scmp.eq.s32.totalorder %s17, 3
      %p68 = scmp.ne.s32.totalorder %s63, %s65
      %p69 = scmp.eq.s32.totalorder %s17, 0
      %p70 = por %p68, %p69
      %p71 = scmp.ne.s32.totalorder %s63, %s65
      %p72 = scmp.eq.s32.totalorder %s22, 3
      %p73 = por %p71, %p72
      %p74 = scmp.ne.s32.totalorder %s65, %s66
      %p75 = scmp.eq.s32.totalorder %s22, 0
      %p76 = por %p74, %p75
      %p77 = scmp.ne.s32.totalorder %s65, %s66
      %p78 = scmp.eq.s32.totalorder %s23, 3
      %p79 = por %p77, %p78
      %p81 = scmp.ne.s32.totalorder %s66, %s80
      %p82 = scmp.eq.s32.totalorder %s23, 0
      %p83 = por %p81, %p82
      %s85 = sadd.s32 %s84, 1
      %p88 = scmp.eq.s32.totalorder %s17, 3
      %p89 = scmp.ne.s32.totalorder %s84, %s86
      %p90 = scmp.eq.s32.totalorder %s17, 0
      %p91 = por %p89, %p90
      %p92 = scmp.ne.s32.totalorder %s84, %s86
      %p93 = scmp.eq.s32.totalorder %s22, 3
      %p94 = por %p92, %p93
      %p95 = scmp.ne.s32.totalorder %s86, %s87
      %p96 = scmp.eq.s32.totalorder %s22, 0
      %p97 = por %p95, %p96
      %p98 = scmp.ne.s32.totalorder %s86, %s87
      %p99 = scmp.eq.s32.totalorder %s23, 3
      %p100 = por %p98, %p99
      %p102 = scmp.ne.s32.totalorder %s87, %s101
      %p103 = scmp.eq.s32.totalorder %s23, 0
      %p104 = por %p102, %p103
      %s105 = ssub.s32 %s24, %s36
      %s106 = ssub.s32 %s25, %s32
      %s107 = sor.u32 %s105, %s106
      %p108 = scmp.eq.s32.totalorder %s107, 0
      %s110 = sadd.s32 %s109, 1
      %s111 = scalar_select %p108, %s109, %s110
      %p114 = pneg %p108
      %p115 = scmp.eq.s32.totalorder %s17, 3
      %p116 = por %p114, %p115
      %p117 = scmp.ne.s32.totalorder %s109, %s112
      %p118 = scmp.eq.s32.totalorder %s17, 0
      %p119 = por %p117, %p118
      %p120 = scmp.ne.s32.totalorder %s109, %s112
      %p121 = scmp.eq.s32.totalorder %s22, 3
      %p122 = por %p120, %p121
      %p123 = scmp.ne.s32.totalorder %s112, %s113
      %p124 = scmp.eq.s32.totalorder %s22, 0
      %p125 = por %p123, %p124
      %p126 = scmp.ne.s32.totalorder %s112, %s113
      %p127 = scmp.eq.s32.totalorder %s23, 3
      %p128 = por %p126, %p127
      %p130 = scmp.ne.s32.totalorder %s113, %s129
      %p131 = scmp.eq.s32.totalorder %s23, 0
      %p132 = por %p130, %p131
      %s133 = ssub.s32 %s24, %s36
      %s134 = ssub.s32 %s25, %s32
      %s135 = sor.u32 %s133, %s134
      %p136 = scmp.eq.s32.totalorder %s135, 0
      %s138 = sadd.s32 %s137, 1
      %s139 = scalar_select %p136, %s137, %s138
      %p142 = pneg %p136
      %p143 = scmp.eq.s32.totalorder %s17, 3
      %p144 = por %p142, %p143
      %p145 = scmp.ne.s32.totalorder %s137, %s140
      %p146 = scmp.eq.s32.totalorder %s17, 0
      %p147 = por %p145, %p146
      %p148 = scmp.ne.s32.totalorder %s137, %s140
      %p149 = scmp.eq.s32.totalorder %s22, 3
      %p150 = por %p148, %p149
      %p151 = scmp.ne.s32.totalorder %s140, %s141
      %p152 = scmp.eq.s32.totalorder %s22, 0
      %p153 = por %p151, %p152
      %p154 = scmp.ne.s32.totalorder %s140, %s141
      %p155 = scmp.eq.s32.totalorder %s23, 3
      %p156 = por %p154, %p155
      %p158 = scmp.ne.s32.totalorder %s141, %s157
      %p159 = scmp.eq.s32.totalorder %s23, 0
      %p160 = por %p158, %p159
      %p161 = scmp.le.s32.totalorder 1, %s17
      %p162 = scmp.lt.s32.totalorder %s17, 5
      %p163 = pnand %p161, %p162
      %p164 = pneg %p163
      // Predicated region
      $region9: #{tpu_custom_call.1} parent=5 // pred_check
        _
      $region10: #{tpu_custom_call.1} parent=5 // pred_check_branch
        %166 = sbr.rel (%p163) target = $region12
      $region11: #{tpu_custom_call.1} parent=5 // pred_region
        %s167 = ssub.s32 %s17, 1
        // Predicated region
        $region13: #{tpu_custom_call.1} parent=11 // pred_check
          %p168 = pneg %p76
        $region14: #{tpu_custom_call.1} parent=11 // pred_check_branch
          %170 = sbr.rel (%p168) target = $region16
        $region15: #{tpu_custom_call.1} parent=11 // pred_region
          _
        $region16: #{tpu_custom_call.1} parent=11 // pred_fallthru
          _
        // Predicated region
        $region17: #{tpu_custom_call.1} parent=11 // pred_check
          %p171 = pneg %p97
        $region18: #{tpu_custom_call.1} parent=11 // pred_check_branch
          %173 = sbr.rel (%p171) target = $region20
        $region19: #{tpu_custom_call.1} parent=11 // pred_region
          _
        $region20: #{tpu_custom_call.1} parent=11 // pred_fallthru
          _
      $region12: #{tpu_custom_call.1} parent=5 // pred_fallthru
        _
      %p174 = scmp.lt.s32.totalorder %s17, 4
      // Predicated region
      $region21: #{tpu_custom_call.1} parent=5 // pred_check
        %p175 = pneg %p174
      $region22: #{tpu_custom_call.1} parent=5 // pred_check_branch
        %177 = sbr.rel (%p175) target = $region24
      $region23: #{tpu_custom_call.1} parent=5 // pred_region
        // Predicated region
        $region25: #{tpu_custom_call.1} parent=23 // pred_check
          %p178 = pneg %p49
        $region26: #{tpu_custom_call.1} parent=23 // pred_check_branch
          %180 = sbr.rel (%p178) target = $region28
        $region27: #{tpu_custom_call.1} parent=23 // pred_region
          %p181 = scmp.lt.s32.totalorder %s24, 1
          %s182 = scalar_select %p181, %s24, 1
          %s183 = smul.addr %s182, 54
          %s184 = smul.addr %s183, 4
          %s185 = scalar_lea.vmem %s0, %s184
        $region28: #{tpu_custom_call.1} parent=23 // pred_fallthru
          _
      $region24: #{tpu_custom_call.1} parent=5 // pred_fallthru
        _
      %p186 = scmp.le.s32.totalorder 1, %s17
      %p187 = scmp.lt.s32.totalorder %s17, 5
      %p188 = pnand %p186, %p187
      %p189 = pneg %p188
      // Predicated region
      $region29: #{tpu_custom_call.1} parent=5 // pred_check
        _
      $region30: #{tpu_custom_call.1} parent=5 // pred_check_branch
        %191 = sbr.rel (%p188) target = $region32
      $region31: #{tpu_custom_call.1} parent=5 // pred_region
        %s192 = ssub.s32 %s17, 1
        %p193 = scmp.lt.s32.totalorder %s26, 1
        %s194 = scalar_select %p193, %s26, 1
        %s195 = smul.addr %s194, 54
        %s196 = smul.addr %s195, 4
        %s197 = scalar_lea.vmem %s0, %s196
        %p198 = pneg %p55
        %p199 = pneg %p52
        %p200 = pneg %p76
        %p201 = pneg %p73
        %p202 = pneg %p97
        %p203 = pneg %p94
        %p204 = pneg %p125
        %p205 = pneg %p122
        %s206 = sand.u32 %s112, 1
        %s207 = scalar_lea.sflag [#allocation3], %s206
        %s208 = sand.u32 %s112, 1
        %s209 = smul.addr %s208, 128
        %s210 = scalar_lea.vmem [#allocation2], %s209
        %p211 = pneg %p153
        %p212 = pneg %p150
        %s213 = sand.u32 %s140, 1
        %s214 = scalar_lea.sflag [#allocation5], %s213
        %s215 = sand.u32 %s140, 1
        %s216 = smul.addr %s215, 2
        %s217 = scalar_lea.vmem [#allocation4], %s216
        %p218 = scmp.lt.s32.totalorder %s26, 1
        %s219 = scalar_select %p218, %s26, 1
        %s220 = smul.addr %s219, 54
        %s221 = smul.addr %s220, 4
        %s222 = scalar_lea.vmem %s0, %s221
        %s223 = smul.u32 16, %s27
        %s225 = smul.u32 %s27, 8
        %s226 = smul.u32 %s225, 3
        %s227 = smul.addr %s226, 4
        %s228 = scalar_lea.vmem %s222, %s227
        %v229 = vld [vmem:[%s228] sm:$0xf]
        %v230 = vld [vmem:[%s228 + $0x4] sm:$0xf]
        %v231 = vld [vmem:[%s228 + $0xc] sm:$0xf]
        %v232 = vld [vmem:[%s228 + $0x10] sm:$0xf]
        %v233 = vld [vmem:[%s228 + $0x18] sm:$0xf]
        %v234 = vld [vmem:[%s228 + $0x1c] sm:$0xf]
        %v235 = vld [vmem:[%s228 + $0x24] sm:$0xf]
        %v236 = vld [vmem:[%s228 + $0x28] sm:$0xf]
        %v237 = vld [vmem:[%s228 + $0x30] sm:$0xf]
        %v238 = vld [vmem:[%s228 + $0x34] sm:$0xf]
        %v239 = vld [vmem:[%s228 + $0x3c] sm:$0xf]
        %v240 = vld [vmem:[%s228 + $0x40] sm:$0xf]
        %v241 = vld [vmem:[%s228 + $0x48] sm:$0xf]
        %v242 = vld [vmem:[%s228 + $0x4c] sm:$0xf]
        %v243 = vld [vmem:[%s228 + $0x54] sm:$0xf]
        %v244 = vld [vmem:[%s228 + $0x58] sm:$0xf]
        %v245 = vld [vmem:[%s1] sm:$0xf]
        %v246 = vld [vmem:[%s228 + $0x8] sm:$0x1]
        %v247 = vld [vmem:[%s228 + $0x14] sm:$0x1]
        %v248 = vld [vmem:[%s228 + $0x20] sm:$0x1]
        %v249 = vld [vmem:[%s228 + $0x2c] sm:$0x1]
        %v250 = vld [vmem:[%s228 + $0x38] sm:$0x1]
        %v251 = vld [vmem:[%s228 + $0x44] sm:$0x1]
        %v252 = vld [vmem:[%s228 + $0x50] sm:$0x1]
        %v253 = vld [vmem:[%s228 + $0x5c] sm:$0x1]
        %vm254 = vsmask.f32 3328
        %vm255 = vsmask.f32 7440
        %vm256 = vmor %vm254, %vm255
        %v258 = vshrl.u32 %v229, 16
        %v260 = vrot.slane %v258, 4
        %v261 = vshll.u32 %v229, 16
        %v263 = vrot.slane %v261, 5
        %v264 = vor.u32 %v260, %v263
        %v265 = vrot.slane %v264, 4
        %v267 = vshll.u32 %v230, 16
        %v269 = vrot.slane %v267, 5
        %v270 = vsel %vm256, %v265, %v269
        %v271 = vshrl.u32 %v230, 16
        %v273 = vrot.slane %v271, 4
        %v274 = vor.u32 %v273, %v269
        %v275 = vrot.slane %v274, 4
        %v277 = vshll.u32 %v246, 16
        %v279 = vrot.slane %v277, 5
        %v280 = vsel %vm256, %v275, %v279
        %v282 = vshrl.u32 %v231, 16
        %v284 = vrot.slane %v282, 4
        %v285 = vshll.u32 %v231, 16
        %v287 = vrot.slane %v285, 5
        %v288 = vor.u32 %v284, %v287
        %v289 = vrot.slane %v288, 4
        %v291 = vshll.u32 %v232, 16
        %v293 = vrot.slane %v291, 5
        %v294 = vsel %vm256, %v289, %v293
        %v295 = vshrl.u32 %v232, 16
        %v297 = vrot.slane %v295, 4
        %v298 = vor.u32 %v297, %v293
        %v299 = vrot.slane %v298, 4
        %v301 = vshll.u32 %v247, 16
        %v303 = vrot.slane %v301, 5
        %v304 = vsel %vm256, %v299, %v303
        %v306 = vshrl.u32 %v233, 16
        %v308 = vrot.slane %v306, 4
        %v309 = vshll.u32 %v233, 16
        %v311 = vrot.slane %v309, 5
        %v312 = vor.u32 %v308, %v311
        %v313 = vrot.slane %v312, 4
        %v315 = vshll.u32 %v234, 16
        %v317 = vrot.slane %v315, 5
        %v318 = vsel %vm256, %v313, %v317
        %v319 = vshrl.u32 %v234, 16
        %v321 = vrot.slane %v319, 4
        %v322 = vor.u32 %v321, %v317
        %v323 = vrot.slane %v322, 4
        %v325 = vshll.u32 %v248, 16
        %v327 = vrot.slane %v325, 5
        %v328 = vsel %vm256, %v323, %v327
        %v330 = vshrl.u32 %v235, 16
        %v332 = vrot.slane %v330, 4
        %v333 = vshll.u32 %v235, 16
        %v335 = vrot.slane %v333, 5
        %v336 = vor.u32 %v332, %v335
        %v337 = vrot.slane %v336, 4
        %v339 = vshll.u32 %v236, 16
        %v341 = vrot.slane %v339, 5
        %v342 = vsel %vm256, %v337, %v341
        %v343 = vshrl.u32 %v236, 16
        %v345 = vrot.slane %v343, 4
        %v346 = vor.u32 %v345, %v341
        %v347 = vrot.slane %v346, 4
        %v349 = vshll.u32 %v249, 16
        %v351 = vrot.slane %v349, 5
        %v352 = vsel %vm256, %v347, %v351
        %v354 = vshrl.u32 %v237, 16
        %v356 = vrot.slane %v354, 4
        %v357 = vshll.u32 %v237, 16
        %v359 = vrot.slane %v357, 5
        %v360 = vor.u32 %v356, %v359
        %v361 = vrot.slane %v360, 4
        %v363 = vshll.u32 %v238, 16
        %v365 = vrot.slane %v363, 5
        %v366 = vsel %vm256, %v361, %v365
        %v367 = vshrl.u32 %v238, 16
        %v369 = vrot.slane %v367, 4
        %v370 = vor.u32 %v369, %v365
        %v371 = vrot.slane %v370, 4
        %v373 = vshll.u32 %v250, 16
        %v375 = vrot.slane %v373, 5
        %v376 = vsel %vm256, %v371, %v375
        %v378 = vshrl.u32 %v239, 16
        %v380 = vrot.slane %v378, 4
        %v381 = vshll.u32 %v239, 16
        %v383 = vrot.slane %v381, 5
        %v384 = vor.u32 %v380, %v383
        %v385 = vrot.slane %v384, 4
        %v387 = vshll.u32 %v240, 16
        %v389 = vrot.slane %v387, 5
        %v390 = vsel %vm256, %v385, %v389
        %v391 = vshrl.u32 %v240, 16
        %v393 = vrot.slane %v391, 4
        %v394 = vor.u32 %v393, %v389
        %v395 = vrot.slane %v394, 4
        %v397 = vshll.u32 %v251, 16
        %v399 = vrot.slane %v397, 5
        %v400 = vsel %vm256, %v395, %v399
        %v402 = vshrl.u32 %v241, 16
        %v404 = vrot.slane %v402, 4
        %v405 = vshll.u32 %v241, 16
        %v407 = vrot.slane %v405, 5
        %v408 = vor.u32 %v404, %v407
        %v409 = vrot.slane %v408, 4
        %v411 = vshll.u32 %v242, 16
        %v413 = vrot.slane %v411, 5
        %v414 = vsel %vm256, %v409, %v413
        %v415 = vshrl.u32 %v242, 16
        %v417 = vrot.slane %v415, 4
        %v418 = vor.u32 %v417, %v413
        %v419 = vrot.slane %v418, 4
        %v421 = vshll.u32 %v252, 16
        %v423 = vrot.slane %v421, 5
        %v424 = vsel %vm256, %v419, %v423
        %v426 = vshrl.u32 %v243, 16
        %v428 = vrot.slane %v426, 4
        %v429 = vshll.u32 %v243, 16
        %v431 = vrot.slane %v429, 5
        %v432 = vor.u32 %v428, %v431
        %v433 = vrot.slane %v432, 4
        %v435 = vshll.u32 %v244, 16
        %v437 = vrot.slane %v435, 5
        %v438 = vsel %vm256, %v433, %v437
        %v439 = vshrl.u32 %v244, 16
        %v441 = vrot.slane %v439, 4
        %v442 = vor.u32 %v441, %v437
        %v443 = vrot.slane %v442, 4
        %v445 = vshll.u32 %v253, 16
        %v447 = vrot.slane %v445, 5
        %v448 = vsel %vm256, %v443, %v447
        %s449 = scalar_lea.vmem %s1, 4
        %v450 = vld [vmem:[%s449] sm:$0xf]
        %v451 = vunpack.c.l.b16 %v270
        %v452 = vunpack.c.l.b16 %v280
        %v453 = vunpack.c.l.b16 %v294
        %v454 = vunpack.c.l.b16 %v304
        %v455 = vunpack.c.l.b16 %v318
        %v456 = vunpack.c.l.b16 %v328
        %v457 = vunpack.c.l.b16 %v342
        %v458 = vunpack.c.l.b16 %v352
        %v459 = vunpack.c.l.b16 %v366
        %v460 = vunpack.c.l.b16 %v376
        %v461 = vunpack.c.l.b16 %v390
        %v462 = vunpack.c.l.b16 %v400
        %v463 = vunpack.c.l.b16 %v414
        %v464 = vunpack.c.l.b16 %v424
        %v465 = vunpack.c.l.b16 %v438
        %v466 = vunpack.c.l.b16 %v448
        %v467 = vpack.c.b16 %v452, %v451
        %v468 = vpack.c.b16 %v454, %v453
        %v469 = vpack.c.b16 %v456, %v455
        %v470 = vpack.c.b16 %v458, %v457
        %v471 = vpack.c.b16 %v460, %v459
        %v472 = vpack.c.b16 %v462, %v461
        %v473 = vpack.c.b16 %v464, %v463
        %v474 = vpack.c.b16 %v466, %v465
        %vm475 = vcmask 64512
        %v477 = vsel %vm475, %v467, 0
        %v480 = vsel %vm475, %v468, 0
        %v483 = vsel %vm475, %v469, 0
        %v486 = vsel %vm475, %v470, 0
        %v489 = vsel %vm475, %v471, 0
        %v492 = vsel %vm475, %v472, 0
        %v495 = vsel %vm475, %v473, 0
        %v498 = vsel %vm475, %v474, 0
        %vm500 = vcmask 1043456
        %v502 = vsel %vm500, %v450, 0
        %504 = vmatprep.subr.bf16.mxu0 0
        %505 = vmatpush1.bf16.msra.mxu0 %v502
        %506 = vmatprep.subr.bf16.mxu0 0
        %507 = vmatpush1.bf16.msra.mxu0 0
        %508 = vmatprep.subr.bf16.mxu0 0
        %509 = vmatpush1.bf16.msra.mxu0 0
        %510 = vmatprep.subr.bf16.mxu0 0
        %511 = vmatpush1.bf16.msra.mxu0 0
        %512 = vmatprep.subr.bf16.mxu0 0
        %513 = vmatpush1.bf16.msra.mxu0 0
        %514 = vmatprep.subr.bf16.mxu0 0
        %515 = vmatpush1.bf16.msra.mxu0 0
        %516 = vmatprep.subr.bf16.mxu0 0
        %517 = vmatpush1.bf16.msra.mxu0 0
        %518 = vmatprep.subr.bf16.mxu0 0
        %519 = vmatpush1.bf16.msra.mxu0 0
        %520 = vmatprep.subr.bf16.mxu0 0
        %521 = vmatpush1.bf16.msra.mxu0 0
        %522 = vmatprep.subr.bf16.mxu0 0
        %523 = vmatpush1.bf16.msra.mxu0 0
        %524 = vmatprep.subr.bf16.mxu0 0
        %525 = vmatpush1.bf16.msra.mxu0 0
        %526 = vmatprep.subr.bf16.mxu0 0
        %527 = vmatpush1.bf16.msra.mxu0 0
        %528 = vmatprep.subr.bf16.mxu0 0
        %529 = vmatpush1.bf16.msra.mxu0 0
        %530 = vmatprep.subr.bf16.mxu0 0
        %531 = vmatpush1.bf16.msra.mxu0 0
        %532 = vmatprep.subr.bf16.mxu0 0
        %533 = vmatpush1.bf16.msra.mxu0 0
        %534 = vmatprep.subr.bf16.mxu0 0
        %535 = vmatpush1.bf16.msra.mxu0 0
        %536 = vmatprep.mubr.bf16.mxu0 0
        %537 = vmatmul.mubr.bf16.gmra.mrb[0].mxu0 %v477
        %v538 = vpop.f32.mrb[0].mxu0
        %v539 = vadd.f32 0.0, %v538
        %v540 = vpop.f32.mrb[0].mxu0
        %v541 = vpop.f32.mrb[0].mxu0
        %v542 = vadd.f32 0.0, %v541
        %v543 = vpop.f32.mrb[0].mxu0
        %544 = vmatprep.mubr.bf16.mxu0 0
        %545 = vmatmul.mubr.bf16.gmra.mrb[0].mxu0 %v480
        %v546 = vpop.f32.mrb[0].mxu0
        %v547 = vadd.f32 0.0, %v546
        %v548 = vpop.f32.mrb[0].mxu0
        %v549 = vpop.f32.mrb[0].mxu0
        %v550 = vadd.f32 0.0, %v549
        %v551 = vpop.f32.mrb[0].mxu0
        %552 = vmatprep.mubr.bf16.mxu0 0
        %553 = vmatmul.mubr.bf16.gmra.mrb[0].mxu0 %v483
        %v554 = vpop.f32.mrb[0].mxu0
        %v555 = vadd.f32 0.0, %v554
        %v556 = vpop.f32.mrb[0].mxu0
        %v557 = vpop.f32.mrb[0].mxu0
        %v558 = vadd.f32 0.0, %v557
        %v559 = vpop.f32.mrb[0].mxu0
        %560 = vmatprep.mubr.bf16.mxu0 0
        %561 = vmatmul.mubr.bf16.gmra.mrb[0].mxu0 %v486
        %v562 = vpop.f32.mrb[0].mxu0
        %v563 = vadd.f32 0.0, %v562
        %v564 = vpop.f32.mrb[0].mxu0
        %v565 = vpop.f32.mrb[0].mxu0
        %v566 = vadd.f32 0.0, %v565
        %v567 = vpop.f32.mrb[0].mxu0
        %568 = vmatprep.mubr.bf16.mxu0 0
        %569 = vmatmul.mubr.bf16.gmra.mrb[0].mxu0 %v489
        %v570 = vpop.f32.mrb[0].mxu0
        %v571 = vadd.f32 0.0, %v570
        %v572 = vpop.f32.mrb[0].mxu0
        %v573 = vpop.f32.mrb[0].mxu0
        %v574 = vadd.f32 0.0, %v573
        %v575 = vpop.f32.mrb[0].mxu0
        %576 = vmatprep.mubr.bf16.mxu0 0
        %577 = vmatmul.mubr.bf16.gmra.mrb[0].mxu0 %v492
        %v578 = vpop.f32.mrb[0].mxu0
        %v579 = vadd.f32 0.0, %v578
        %v580 = vpop.f32.mrb[0].mxu0
        %v581 = vpop.f32.mrb[0].mxu0
        %v582 = vadd.f32 0.0, %v581
        %v583 = vpop.f32.mrb[0].mxu0
        %584 = vmatprep.mubr.bf16.mxu0 0
        %585 = vmatmul.mubr.bf16.gmra.mrb[0].mxu0 %v495
        %v586 = vpop.f32.mrb[0].mxu0
        %v587 = vadd.f32 0.0, %v586
        %v588 = vpop.f32.mrb[0].mxu0
        %v589 = vpop.f32.mrb[0].mxu0
        %v590 = vadd.f32 0.0, %v589
        %v591 = vpop.f32.mrb[0].mxu0
        %592 = vmatprep.mubr.bf16.mxu0 0
        %593 = vmatmul.mubr.bf16.gmra.mrb[0].mxu0 %v498
        %v594 = vpop.f32.mrb[0].mxu0
        %v595 = vadd.f32 0.0, %v594
        %v596 = vpop.f32.mrb[0].mxu0
        %v597 = vpop.f32.mrb[0].mxu0
        %v598 = vadd.f32 0.0, %v597
        %v599 = vpop.f32.mrb[0].mxu0
        %600 = vdwg.mxu0
        %v617 = vunpack.c.l.b16 %v229
        %v618 = vunpack.c.l.b16 %v230
        %v619 = vunpack.c.l.b16 %v231
        %v620 = vunpack.c.l.b16 %v232
        %v621 = vunpack.c.l.b16 %v233
        %v622 = vunpack.c.l.b16 %v234
        %v623 = vunpack.c.l.b16 %v235
        %v624 = vunpack.c.l.b16 %v236
        %v625 = vunpack.c.l.b16 %v237
        %v626 = vunpack.c.l.b16 %v238
        %v627 = vunpack.c.l.b16 %v239
        %v628 = vunpack.c.l.b16 %v240
        %v629 = vunpack.c.l.b16 %v241
        %v630 = vunpack.c.l.b16 %v242
        %v631 = vunpack.c.l.b16 %v243
        %v632 = vunpack.c.l.b16 %v244
        %v633 = vpack.c.b16 %v618, %v617
        %v634 = vpack.c.b16 %v620, %v619
        %v635 = vpack.c.b16 %v622, %v621
        %v636 = vpack.c.b16 %v624, %v623
        %v637 = vpack.c.b16 %v626, %v625
        %v638 = vpack.c.b16 %v628, %v627
        %v639 = vpack.c.b16 %v630, %v629
        %v640 = vpack.c.b16 %v632, %v631
        %v642 = vsel %vm475, %v633, 0
        %v645 = vsel %vm475, %v634, 0
        %v648 = vsel %vm475, %v635, 0
        %v651 = vsel %vm475, %v636, 0
        %v654 = vsel %vm475, %v637, 0
        %v657 = vsel %vm475, %v638, 0
        %v660 = vsel %vm475, %v639, 0
        %v663 = vsel %vm475, %v640, 0
        %v666 = vsel %vm500, %v245, 0
        %668 = vmatprep.subr.bf16.mxu0 0
        %669 = vmatpush1.bf16.msra.mxu0 %v666
        %670 = vmatprep.subr.bf16.mxu0 0
        %671 = vmatpush1.bf16.msra.mxu0 0
        %672 = vmatprep.subr.bf16.mxu0 0
        %673 = vmatpush1.bf16.msra.mxu0 0
        %674 = vmatprep.subr.bf16.mxu0 0
        %675 = vmatpush1.bf16.msra.mxu0 0
        %676 = vmatprep.subr.bf16.mxu0 0
        %677 = vmatpush1.bf16.msra.mxu0 0
        %678 = vmatprep.subr.bf16.mxu0 0
        %679 = vmatpush1.bf16.msra.mxu0 0
        %680 = vmatprep.subr.bf16.mxu0 0
        %681 = vmatpush1.bf16.msra.mxu0 0
        %682 = vmatprep.subr.bf16.mxu0 0
        %683 = vmatpush1.bf16.msra.mxu0 0
        %684 = vmatprep.subr.bf16.mxu0 0
        %685 = vmatpush1.bf16.msra.mxu0 0
        %686 = vmatprep.subr.bf16.mxu0 0
        %687 = vmatpush1.bf16.msra.mxu0 0
        %688 = vmatprep.subr.bf16.mxu0 0
        %689 = vmatpush1.bf16.msra.mxu0 0
        %690 = vmatprep.subr.bf16.mxu0 0
        %691 = vmatpush1.bf16.msra.mxu0 0
        %692 = vmatprep.subr.bf16.mxu0 0
        %693 = vmatpush1.bf16.msra.mxu0 0
        %694 = vmatprep.subr.bf16.mxu0 0
        %695 = vmatpush1.bf16.msra.mxu0 0
        %696 = vmatprep.subr.bf16.mxu0 0
        %697 = vmatpush1.bf16.msra.mxu0 0
        %698 = vmatprep.subr.bf16.mxu0 0
        %699 = vmatpush1.bf16.msra.mxu0 0
        %700 = vmatprep.mubr.bf16.mxu0 0
        %701 = vmatmul.mubr.bf16.gmra.mrb[0].mxu0 %v642
        %v702 = vpop.f32.mrb[0].mxu0
        %v703 = vadd.f32 %v539, %v702
        %v704 = vpop.f32.mrb[0].mxu0
        %v705 = vpop.f32.mrb[0].mxu0
        %v706 = vadd.f32 %v542, %v705
        %v707 = vpop.f32.mrb[0].mxu0
        %708 = vmatprep.mubr.bf16.mxu0 0
        %709 = vmatmul.mubr.bf16.gmra.mrb[0].mxu0 %v645
        %v710 = vpop.f32.mrb[0].mxu0
        %v711 = vadd.f32 %v547, %v710
        %v712 = vpop.f32.mrb[0].mxu0
        %v713 = vpop.f32.mrb[0].mxu0
        %v714 = vadd.f32 %v550, %v713
        %v715 = vpop.f32.mrb[0].mxu0
        %716 = vmatprep.mubr.bf16.mxu0 0
        %717 = vmatmul.mubr.bf16.gmra.mrb[0].mxu0 %v648
        %v718 = vpop.f32.mrb[0].mxu0
        %v719 = vadd.f32 %v555, %v718
        %v720 = vpop.f32.mrb[0].mxu0
        %v721 = vpop.f32.mrb[0].mxu0
        %v722 = vadd.f32 %v558, %v721
        %v723 = vpop.f32.mrb[0].mxu0
        %724 = vmatprep.mubr.bf16.mxu0 0
        %725 = vmatmul.mubr.bf16.gmra.mrb[0].mxu0 %v651
        %v726 = vpop.f32.mrb[0].mxu0
        %v727 = vadd.f32 %v563, %v726
        %v728 = vpop.f32.mrb[0].mxu0
        %v729 = vpop.f32.mrb[0].mxu0
        %v730 = vadd.f32 %v566, %v729
        %v731 = vpop.f32.mrb[0].mxu0
        %732 = vmatprep.mubr.bf16.mxu0 0
        %733 = vmatmul.mubr.bf16.gmra.mrb[0].mxu0 %v654
        %v734 = vpop.f32.mrb[0].mxu0
        %v735 = vadd.f32 %v571, %v734
        %v736 = vpop.f32.mrb[0].mxu0
        %v737 = vpop.f32.mrb[0].mxu0
        %v738 = vadd.f32 %v574, %v737
        %v739 = vpop.f32.mrb[0].mxu0
        %740 = vmatprep.mubr.bf16.mxu0 0
        %741 = vmatmul.mubr.bf16.gmra.mrb[0].mxu0 %v657
        %v742 = vpop.f32.mrb[0].mxu0
        %v743 = vadd.f32 %v579, %v742
        %v744 = vpop.f32.mrb[0].mxu0
        %v745 = vpop.f32.mrb[0].mxu0
        %v746 = vadd.f32 %v582, %v745
        %v747 = vpop.f32.mrb[0].mxu0
        %748 = vmatprep.mubr.bf16.mxu0 0
        %749 = vmatmul.mubr.bf16.gmra.mrb[0].mxu0 %v660
        %v750 = vpop.f32.mrb[0].mxu0
        %v751 = vadd.f32 %v587, %v750
        %v752 = vpop.f32.mrb[0].mxu0
        %v753 = vpop.f32.mrb[0].mxu0
        %v754 = vadd.f32 %v590, %v753
        %v755 = vpop.f32.mrb[0].mxu0
        %756 = vmatprep.mubr.bf16.mxu0 0
        %757 = vmatmul.mubr.bf16.gmra.mrb[0].mxu0 %v663
        %v758 = vpop.f32.mrb[0].mxu0
        %v759 = vadd.f32 %v595, %v758
        %v760 = vpop.f32.mrb[0].mxu0
        %v761 = vpop.f32.mrb[0].mxu0
        %v762 = vadd.f32 %v598, %v761
        %v763 = vpop.f32.mrb[0].mxu0
        %764 = vdwg.mxu0
        %v765 = vld [vmem:[%s228] sm:$0xe]
        %v766 = vld [vmem:[%s228 + $0xc] sm:$0xe]
        %v767 = vld [vmem:[%s228 + $0x18] sm:$0xe]
        %v768 = vld [vmem:[%s228 + $0x24] sm:$0xe]
        %v769 = vld [vmem:[%s228 + $0x30] sm:$0xe]
        %v770 = vld [vmem:[%s228 + $0x3c] sm:$0xe]
        %v771 = vld [vmem:[%s228 + $0x48] sm:$0xe]
        %v772 = vld [vmem:[%s228 + $0x54] sm:$0xe]
        %vm789 = vcmask 1042432
        %vm790 = vcmask 1046532
        %vm791 = vmor %vm789, %vm790
        %v792 = vrot.slane %v765, 5
        %v793 = vrot.slane %v792, 4
        %v794 = vrot.slane %v230, 5
        %v795 = vsel %vm791, %v793, %v794
        %v796 = vrot.slane %v794, 4
        %v797 = vrot.slane %v246, 5
        %v798 = vsel %vm791, %v796, %v797
        %v799 = vrot.slane %v766, 5
        %v800 = vrot.slane %v799, 4
        %v801 = vrot.slane %v232, 5
        %v802 = vsel %vm791, %v800, %v801
        %v803 = vrot.slane %v801, 4
        %v804 = vrot.slane %v247, 5
        %v805 = vsel %vm791, %v803, %v804
        %v806 = vrot.slane %v767, 5
        %v807 = vrot.slane %v806, 4
        %v808 = vrot.slane %v234, 5
        %v809 = vsel %vm791, %v807, %v808
        %v810 = vrot.slane %v808, 4
        %v811 = vrot.slane %v248, 5
        %v812 = vsel %vm791, %v810, %v811
        %v813 = vrot.slane %v768, 5
        %v814 = vrot.slane %v813, 4
        %v815 = vrot.slane %v236, 5
        %v816 = vsel %vm791, %v814, %v815
        %v817 = vrot.slane %v815, 4
        %v818 = vrot.slane %v249, 5
        %v819 = vsel %vm791, %v817, %v818
        %v820 = vrot.slane %v769, 5
        %v821 = vrot.slane %v820, 4
        %v822 = vrot.slane %v238, 5
        %v823 = vsel %vm791, %v821, %v822
        %v824 = vrot.slane %v822, 4
        %v825 = vrot.slane %v250, 5
        %v826 = vsel %vm791, %v824, %v825
        %v827 = vrot.slane %v770, 5
        %v828 = vrot.slane %v827, 4
        %v829 = vrot.slane %v240, 5
        %v830 = vsel %vm791, %v828, %v829
        %v831 = vrot.slane %v829, 4
        %v832 = vrot.slane %v251, 5
        %v833 = vsel %vm791, %v831, %v832
        %v834 = vrot.slane %v771, 5
        %v835 = vrot.slane %v834, 4
        %v836 = vrot.slane %v242, 5
        %v837 = vsel %vm791, %v835, %v836
        %v838 = vrot.slane %v836, 4
        %v839 = vrot.slane %v252, 5
        %v840 = vsel %vm791, %v838, %v839
        %v841 = vrot.slane %v772, 5
        %v842 = vrot.slane %v841, 4
        %v843 = vrot.slane %v244, 5
        %v844 = vsel %vm791, %v842, %v843
        %v845 = vrot.slane %v843, 4
        %v846 = vrot.slane %v253, 5
        %v847 = vsel %vm791, %v845, %v846
        %s848 = scalar_lea.vmem %s1, 8
        %v849 = vld [vmem:[%s848] sm:$0xf]
        %v850 = vunpack.c.l.b16 %v795
        %v851 = vunpack.c.l.b16 %v798
        %v852 = vunpack.c.l.b16 %v802
        %v853 = vunpack.c.l.b16 %v805
        %v854 = vunpack.c.l.b16 %v809
        %v855 = vunpack.c.l.b16 %v812
        %v856 = vunpack.c.l.b16 %v816
        %v857 = vunpack.c.l.b16 %v819
        %v858 = vunpack.c.l.b16 %v823
        %v859 = vunpack.c.l.b16 %v826
        %v860 = vunpack.c.l.b16 %v830
        %v861 = vunpack.c.l.b16 %v833
        %v862 = vunpack.c.l.b16 %v837
        %v863 = vunpack.c.l.b16 %v840
        %v864 = vunpack.c.l.b16 %v844
        %v865 = vunpack.c.l.b16 %v847
        %v866 = vpack.c.b16 %v851, %v850
        %v867 = vpack.c.b16 %v853, %v852
        %v868 = vpack.c.b16 %v855, %v854
        %v869 = vpack.c.b16 %v857, %v856
        %v870 = vpack.c.b16 %v859, %v858
        %v871 = vpack.c.b16 %v861, %v860
        %v872 = vpack.c.b16 %v863, %v862
        %v873 = vpack.c.b16 %v865, %v864
        %v875 = vsel %vm475, %v866, 0
        %v878 = vsel %vm475, %v867, 0
        %v881 = vsel %vm475, %v868, 0
        %v884 = vsel %vm475, %v869, 0
        %v887 = vsel %vm475, %v870, 0
        %v890 = vsel %vm475, %v871, 0
        %v893 = vsel %vm475, %v872, 0
        %v896 = vsel %vm475, %v873, 0
        %v899 = vsel %vm500, %v849, 0
        %901 = vmatprep.subr.bf16.mxu0 0
        %902 = vmatpush1.bf16.msra.mxu0 %v899
        %903 = vmatprep.subr.bf16.mxu0 0
        %904 = vmatpush1.bf16.msra.mxu0 0
        %905 = vmatprep.subr.bf16.mxu0 0
        %906 = vmatpush1.bf16.msra.mxu0 0
        %907 = vmatprep.subr.bf16.mxu0 0
        %908 = vmatpush1.bf16.msra.mxu0 0
        %909 = vmatprep.subr.bf16.mxu0 0
        %910 = vmatpush1.bf16.msra.mxu0 0
        %911 = vmatprep.subr.bf16.mxu0 0
        %912 = vmatpush1.bf16.msra.mxu0 0
        %913 = vmatprep.subr.bf16.mxu0 0
        %914 = vmatpush1.bf16.msra.mxu0 0
        %915 = vmatprep.subr.bf16.mxu0 0
        %916 = vmatpush1.bf16.msra.mxu0 0
        %917 = vmatprep.subr.bf16.mxu0 0
        %918 = vmatpush1.bf16.msra.mxu0 0
        %919 = vmatprep.subr.bf16.mxu0 0
        %920 = vmatpush1.bf16.msra.mxu0 0
        %921 = vmatprep.subr.bf16.mxu0 0
        %922 = vmatpush1.bf16.msra.mxu0 0
        %923 = vmatprep.subr.bf16.mxu0 0
        %924 = vmatpush1.bf16.msra.mxu0 0
        %925 = vmatprep.subr.bf16.mxu0 0
        %926 = vmatpush1.bf16.msra.mxu0 0
        %927 = vmatprep.subr.bf16.mxu0 0
        %928 = vmatpush1.bf16.msra.mxu0 0
        %929 = vmatprep.subr.bf16.mxu0 0
        %930 = vmatpush1.bf16.msra.mxu0 0
        %931 = vmatprep.subr.bf16.mxu0 0
        %932 = vmatpush1.bf16.msra.mxu0 0
        %933 = vmatprep.mubr.bf16.mxu0 0
        %934 = vmatmul.mubr.bf16.gmra.mrb[0].mxu0 %v875
        %v935 = vpop.f32.mrb[0].mxu0
        %v936 = vadd.f32 0.0, %v935
        %v937 = vpop.f32.mrb[0].mxu0
        %v938 = vpop.f32.mrb[0].mxu0
        %v939 = vadd.f32 0.0, %v938
        %v940 = vpop.f32.mrb[0].mxu0
        %941 = vmatprep.mubr.bf16.mxu0 0
        %942 = vmatmul.mubr.bf16.gmra.mrb[0].mxu0 %v878
        %v943 = vpop.f32.mrb[0].mxu0
        %v944 = vadd.f32 0.0, %v943
        %v945 = vpop.f32.mrb[0].mxu0
        %v946 = vpop.f32.mrb[0].mxu0
        %v947 = vadd.f32 0.0, %v946
        %v948 = vpop.f32.mrb[0].mxu0
        %949 = vmatprep.mubr.bf16.mxu0 0
        %950 = vmatmul.mubr.bf16.gmra.mrb[0].mxu0 %v881
        %v951 = vpop.f32.mrb[0].mxu0
        %v952 = vadd.f32 0.0, %v951
        %v953 = vpop.f32.mrb[0].mxu0
        %v954 = vpop.f32.mrb[0].mxu0
        %v955 = vadd.f32 0.0, %v954
        %v956 = vpop.f32.mrb[0].mxu0
        %957 = vmatprep.mubr.bf16.mxu0 0
        %958 = vmatmul.mubr.bf16.gmra.mrb[0].mxu0 %v884
        %v959 = vpop.f32.mrb[0].mxu0
        %v960 = vadd.f32 0.0, %v959
        %v961 = vpop.f32.mrb[0].mxu0
        %v962 = vpop.f32.mrb[0].mxu0
        %v963 = vadd.f32 0.0, %v962
        %v964 = vpop.f32.mrb[0].mxu0
        %965 = vmatprep.mubr.bf16.mxu0 0
        %966 = vmatmul.mubr.bf16.gmra.mrb[0].mxu0 %v887
        %v967 = vpop.f32.mrb[0].mxu0
        %v968 = vadd.f32 0.0, %v967
        %v969 = vpop.f32.mrb[0].mxu0
        %v970 = vpop.f32.mrb[0].mxu0
        %v971 = vadd.f32 0.0, %v970
        %v972 = vpop.f32.mrb[0].mxu0
        %973 = vmatprep.mubr.bf16.mxu0 0
        %974 = vmatmul.mubr.bf16.gmra.mrb[0].mxu0 %v890
        %v975 = vpop.f32.mrb[0].mxu0
        %v976 = vadd.f32 0.0, %v975
        %v977 = vpop.f32.mrb[0].mxu0
        %v978 = vpop.f32.mrb[0].mxu0
        %v979 = vadd.f32 0.0, %v978
        %v980 = vpop.f32.mrb[0].mxu0
        %981 = vmatprep.mubr.bf16.mxu0 0
        %982 = vmatmul.mubr.bf16.gmra.mrb[0].mxu0 %v893
        %v983 = vpop.f32.mrb[0].mxu0
        %v984 = vadd.f32 0.0, %v983
        %v985 = vpop.f32.mrb[0].mxu0
        %v986 = vpop.f32.mrb[0].mxu0
        %v987 = vadd.f32 0.0, %v986
        %v988 = vpop.f32.mrb[0].mxu0
        %989 = vmatprep.mubr.bf16.mxu0 0
        %990 = vmatmul.mubr.bf16.gmra.mrb[0].mxu0 %v896
        %v991 = vpop.f32.mrb[0].mxu0
        %v992 = vadd.f32 0.0, %v991
        %v993 = vpop.f32.mrb[0].mxu0
        %v994 = vpop.f32.mrb[0].mxu0
        %v995 = vadd.f32 0.0, %v994
        %v996 = vpop.f32.mrb[0].mxu0
        %997 = vdwg.mxu0
        %v998 = vadd.f32 %v703, %v936
        %v999 = vadd.f32 %v706, %v939
        %v1000 = vadd.f32 %v711, %v944
        %v1001 = vadd.f32 %v714, %v947
        %v1002 = vadd.f32 %v719, %v952
        %v1003 = vadd.f32 %v722, %v955
        %v1004 = vadd.f32 %v727, %v960
        %v1005 = vadd.f32 %v730, %v963
        %v1006 = vadd.f32 %v735, %v968
        %v1007 = vadd.f32 %v738, %v971
        %v1008 = vadd.f32 %v743, %v976
        %v1009 = vadd.f32 %v746, %v979
        %v1010 = vadd.f32 %v751, %v984
        %v1011 = vadd.f32 %v754, %v987
        %v1012 = vadd.f32 %v759, %v992
        %v1013 = vadd.f32 %v762, %v995
        %s1014 = sadd.s32 %s225, 1
        %s1015 = smul.u32 %s1014, 3
        %s1016 = smul.addr %s1015, 4
        %s1017 = scalar_lea.vmem %s222, %s1016
        %v1018 = vld [vmem:[%s1017] sm:$0xf]
        %v1019 = vld [vmem:[%s1017 + $0x4] sm:$0xf]
        %v1020 = vld [vmem:[%s1017 + $0xc] sm:$0xf]
        %v1021 = vld [vmem:[%s1017 + $0x10] sm:$0xf]
        %v1022 = vld [vmem:[%s1017 + $0x18] sm:$0xf]
        %v1023 = vld [vmem:[%s1017 + $0x1c] sm:$0xf]
        %v1024 = vld [vmem:[%s1017 + $0x24] sm:$0xf]
        %v1025 = vld [vmem:[%s1017 + $0x28] sm:$0xf]
        %v1026 = vld [vmem:[%s1017 + $0x30] sm:$0xf]
        %v1027 = vld [vmem:[%s1017 + $0x34] sm:$0xf]
        %v1028 = vld [vmem:[%s1017 + $0x3c] sm:$0xf]
        %v1029 = vld [vmem:[%s1017 + $0x40] sm:$0xf]
        %v1030 = vld [vmem:[%s1017 + $0x48] sm:$0xf]
        %v1031 = vld [vmem:[%s1017 + $0x4c] sm:$0xf]
        %v1032 = vld [vmem:[%s1017 + $0x54] sm:$0xf]
        %v1033 = vld [vmem:[%s1017 + $0x58] sm:$0xf]
        %s1034 = scalar_lea.vmem %s1, 12
        %v1035 = vld [vmem:[%s1034] sm:$0xf]
        %v1052 = vunpack.c.l.b16 %v1018
        %v1053 = vunpack.c.l.b16 %v1019
        %v1054 = vunpack.c.l.b16 %v1020
        %v1055 = vunpack.c.l.b16 %v1021
        %v1056 = vunpack.c.l.b16 %v1022
        %v1057 = vunpack.c.l.b16 %v1023
        %v1058 = vunpack.c.l.b16 %v1024
        %v1059 = vunpack.c.l.b16 %v1025
        %v1060 = vunpack.c.l.b16 %v1026
        %v1061 = vunpack.c.l.b16 %v1027
        %v1062 = vunpack.c.l.b16 %v1028
        %v1063 = vunpack.c.l.b16 %v1029
        %v1064 = vunpack.c.l.b16 %v1030
        %v1065 = vunpack.c.l.b16 %v1031
        %v1066 = vunpack.c.l.b16 %v1032
        %v1067 = vunpack.c.l.b16 %v1033
        %v1068 = vpack.c.b16 %v1053, %v1052
        %v1069 = vpack.c.b16 %v1055, %v1054
        %v1070 = vpack.c.b16 %v1057, %v1056
        %v1071 = vpack.c.b16 %v1059, %v1058
        %v1072 = vpack.c.b16 %v1061, %v1060
        %v1073 = vpack.c.b16 %v1063, %v1062
        %v1074 = vpack.c.b16 %v1065, %v1064
        %v1075 = vpack.c.b16 %v1067, %v1066
        %v1077 = vsel %vm475, %v1068, 0
        %v1080 = vsel %vm475, %v1069, 0
        %v1083 = vsel %vm475, %v1070, 0
        %v1086 = vsel %vm475, %v1071, 0
        %v1089 = vsel %vm475, %v1072, 0
        %v1092 = vsel %vm475, %v1073, 0
        %v1095 = vsel %vm475, %v1074, 0
        %v1098 = vsel %vm475, %v1075, 0
        %v1101 = vsel %vm500, %v1035, 0
        %1103 = vmatprep.subr.bf16.mxu0 0
        %1104 = vmatpush1.bf16.msra.mxu0 %v1101
        %1105 = vmatprep.subr.bf16.mxu0 0
        %1106 = vmatpush1.bf16.msra.mxu0 0
        %1107 = vmatprep.subr.bf16.mxu0 0
        %1108 = vmatpush1.bf16.msra.mxu0 0
        %1109 = vmatprep.subr.bf16.mxu0 0
        %1110 = vmatpush1.bf16.msra.mxu0 0
        %1111 = vmatprep.subr.bf16.mxu0 0
        %1112 = vmatpush1.bf16.msra.mxu0 0
        %1113 = vmatprep.subr.bf16.mxu0 0
        %1114 = vmatpush1.bf16.msra.mxu0 0
        %1115 = vmatprep.subr.bf16.mxu0 0
        %1116 = vmatpush1.bf16.msra.mxu0 0
        %1117 = vmatprep.subr.bf16.mxu0 0
        %1118 = vmatpush1.bf16.msra.mxu0 0
        %1119 = vmatprep.subr.bf16.mxu0 0
        %1120 = vmatpush1.bf16.msra.mxu0 0
        %1121 = vmatprep.subr.bf16.mxu0 0
        %1122 = vmatpush1.bf16.msra.mxu0 0
        %1123 = vmatprep.subr.bf16.mxu0 0
        %1124 = vmatpush1.bf16.msra.mxu0 0
        %1125 = vmatprep.subr.bf16.mxu0 0
        %1126 = vmatpush1.bf16.msra.mxu0 0
        %1127 = vmatprep.subr.bf16.mxu0 0
        %1128 = vmatpush1.bf16.msra.mxu0 0
        %1129 = vmatprep.subr.bf16.mxu0 0
        %1130 = vmatpush1.bf16.msra.mxu0 0
        %1131 = vmatprep.subr.bf16.mxu0 0
        %1132 = vmatpush1.bf16.msra.mxu0 0
        %1133 = vmatprep.subr.bf16.mxu0 0
        %1134 = vmatpush1.bf16.msra.mxu0 0
        %1135 = vmatprep.mubr.bf16.mxu0 0
        %1136 = vmatmul.mubr.bf16.gmra.mrb[0].mxu0 %v1077
        %v1137 = vpop.f32.mrb[0].mxu0
        %v1138 = vadd.f32 0.0, %v1137
        %v1139 = vpop.f32.mrb[0].mxu0
        %v1140 = vpop.f32.mrb[0].mxu0
        %v1141 = vadd.f32 0.0, %v1140
        %v1142 = vpop.f32.mrb[0].mxu0
        %1143 = vmatprep.mubr.bf16.mxu0 0
        %1144 = vmatmul.mubr.bf16.gmra.mrb[0].mxu0 %v1080
        %v1145 = vpop.f32.mrb[0].mxu0
        %v1146 = vadd.f32 0.0, %v1145
        %v1147 = vpop.f32.mrb[0].mxu0
        %v1148 = vpop.f32.mrb[0].mxu0
        %v1149 = vadd.f32 0.0, %v1148
        %v1150 = vpop.f32.mrb[0].mxu0
        %1151 = vmatprep.mubr.bf16.mxu0 0
        %1152 = vmatmul.mubr.bf16.gmra.mrb[0].mxu0 %v1083
        %v1153 = vpop.f32.mrb[0].mxu0
        %v1154 = vadd.f32 0.0, %v1153
        %v1155 = vpop.f32.mrb[0].mxu0
        %v1156 = vpop.f32.mrb[0].mxu0
        %v1157 = vadd.f32 0.0, %v1156
        %v1158 = vpop.f32.mrb[0].mxu0
        %1159 = vmatprep.mubr.bf16.mxu0 0
        %1160 = vmatmul.mubr.bf16.gmra.mrb[0].mxu0 %v1086
        %v1161 = vpop.f32.mrb[0].mxu0
        %v1162 = vadd.f32 0.0, %v1161
        %v1163 = vpop.f32.mrb[0].mxu0
        %v1164 = vpop.f32.mrb[0].mxu0
        %v1165 = vadd.f32 0.0, %v1164
        %v1166 = vpop.f32.mrb[0].mxu0
        %1167 = vmatprep.mubr.bf16.mxu0 0
        %1168 = vmatmul.mubr.bf16.gmra.mrb[0].mxu0 %v1089
        %v1169 = vpop.f32.mrb[0].mxu0
        %v1170 = vadd.f32 0.0, %v1169
        %v1171 = vpop.f32.mrb[0].mxu0
        %v1172 = vpop.f32.mrb[0].mxu0
        %v1173 = vadd.f32 0.0, %v1172
        %v1174 = vpop.f32.mrb[0].mxu0
        %1175 = vmatprep.mubr.bf16.mxu0 0
        %1176 = vmatmul.mubr.bf16.gmra.mrb[0].mxu0 %v1092
        %v1177 = vpop.f32.mrb[0].mxu0
        %v1178 = vadd.f32 0.0, %v1177
        %v1179 = vpop.f32.mrb[0].mxu0
        %v1180 = vpop.f32.mrb[0].mxu0
        %v1181 = vadd.f32 0.0, %v1180
        %v1182 = vpop.f32.mrb[0].mxu0
        %1183 = vmatprep.mubr.bf16.mxu0 0
        %1184 = vmatmul.mubr.bf16.gmra.mrb[0].mxu0 %v1095
        %v1185 = vpop.f32.mrb[0].mxu0
        %v1186 = vadd.f32 0.0, %v1185
        %v1187 = vpop.f32.mrb[0].mxu0
        %v1188 = vpop.f32.mrb[0].mxu0
        %v1189 = vadd.f32 0.0, %v1188
        %v1190 = vpop.f32.mrb[0].mxu0
        %1191 = vmatprep.mubr.bf16.mxu0 0
        %1192 = vmatmul.mubr.bf16.gmra.mrb[0].mxu0 %v1098
        %v1193 = vpop.f32.mrb[0].mxu0
        %v1194 = vadd.f32 0.0, %v1193
        %v1195 = vpop.f32.mrb[0].mxu0
        %v1196 = vpop.f32.mrb[0].mxu0
        %v1197 = vadd.f32 0.0, %v1196
        %v1198 = vpop.f32.mrb[0].mxu0
        %1199 = vdwg.mxu0
        %v1200 = vadd.f32 %v998, %v1138
        %v1201 = vadd.f32 %v999, %v1141
        %v1202 = vadd.f32 %v1000, %v1146
        %v1203 = vadd.f32 %v1001, %v1149
        %v1204 = vadd.f32 %v1002, %v1154
        %v1205 = vadd.f32 %v1003, %v1157
        %v1206 = vadd.f32 %v1004, %v1162
        %v1207 = vadd.f32 %v1005, %v1165
        %v1208 = vadd.f32 %v1006, %v1170
        %v1209 = vadd.f32 %v1007, %v1173
        %v1210 = vadd.f32 %v1008, %v1178
        %v1211 = vadd.f32 %v1009, %v1181
        %v1212 = vadd.f32 %v1010, %v1186
        %v1213 = vadd.f32 %v1011, %v1189
        %v1214 = vadd.f32 %v1012, %v1194
        %v1215 = vadd.f32 %v1013, %v1197
        %v1216 = vld [vmem:[%s1017] sm:$0xf]
        %v1217 = vld [vmem:[%s1017 + $0x4] sm:$0xf]
        %v1218 = vld [vmem:[%s1017 + $0x8] sm:$0x1]
        %v1219 = vld [vmem:[%s1017 + $0xc] sm:$0xf]
        %v1220 = vld [vmem:[%s1017 + $0x10] sm:$0xf]
        %v1221 = vld [vmem:[%s1017 + $0x14] sm:$0x1]
        %v1222 = vld [vmem:[%s1017 + $0x18] sm:$0xf]
        %v1223 = vld [vmem:[%s1017 + $0x1c] sm:$0xf]
        %v1224 = vld [vmem:[%s1017 + $0x20] sm:$0x1]
        %v1225 = vld [vmem:[%s1017 + $0x24] sm:$0xf]
        %v1226 = vld [vmem:[%s1017 + $0x28] sm:$0xf]
        %v1227 = vld [vmem:[%s1017 + $0x2c] sm:$0x1]
        %v1228 = vld [vmem:[%s1017 + $0x30] sm:$0xf]
        %v1229 = vld [vmem:[%s1017 + $0x34] sm:$0xf]
        %v1230 = vld [vmem:[%s1017 + $0x38] sm:$0x1]
        %v1231 = vld [vmem:[%s1017 + $0x3c] sm:$0xf]
        %v1232 = vld [vmem:[%s1017 + $0x40] sm:$0xf]
        %v1233 = vld [vmem:[%s1017 + $0x44] sm:$0x1]
        %v1234 = vld [vmem:[%s1017 + $0x48] sm:$0xf]
        %v1235 = vld [vmem:[%s1017 + $0x4c] sm:$0xf]
        %v1236 = vld [vmem:[%s1017 + $0x50] sm:$0x1]
        %v1237 = vld [vmem:[%s1017 + $0x54] sm:$0xf]
        %v1238 = vld [vmem:[%s1017 + $0x58] sm:$0xf]
        %v1239 = vld [vmem:[%s1017 + $0x5c] sm:$0x1]
        %v1241 = vshrl.u32 %v1216, 16
        %v1243 = vrot.slane %v1241, 4
        %v1244 = vshll.u32 %v1216, 16
        %v1246 = vrot.slane %v1244, 5
        %v1247 = vor.u32 %v1243, %v1246
        %v1248 = vrot.slane %v1247, 4
        %v1250 = vshll.u32 %v1217, 16
        %v1252 = vrot.slane %v1250, 5
        %v1253 = vsel %vm256, %v1248, %v1252
        %v1254 = vshrl.u32 %v1217, 16
        %v1256 = vrot.slane %v1254, 4
        %v1257 = vor.u32 %v1256, %v1252
        %v1258 = vrot.slane %v1257, 4
        %v1260 = vshll.u32 %v1218, 16
        %v1262 = vrot.slane %v1260, 5
        %v1263 = vsel %vm256, %v1258, %v1262
        %v1265 = vshrl.u32 %v1219, 16
        %v1267 = vrot.slane %v1265, 4
        %v1268 = vshll.u32 %v1219, 16
        %v1270 = vrot.slane %v1268, 5
        %v1271 = vor.u32 %v1267, %v1270
        %v1272 = vrot.slane %v1271, 4
        %v1274 = vshll.u32 %v1220, 16
        %v1276 = vrot.slane %v1274, 5
        %v1277 = vsel %vm256, %v1272, %v1276
        %v1278 = vshrl.u32 %v1220, 16
        %v1280 = vrot.slane %v1278, 4
        %v1281 = vor.u32 %v1280, %v1276
        %v1282 = vrot.slane %v1281, 4
        %v1284 = vshll.u32 %v1221, 16
        %v1286 = vrot.slane %v1284, 5
        %v1287 = vsel %vm256, %v1282, %v1286
        %v1289 = vshrl.u32 %v1222, 16
        %v1291 = vrot.slane %v1289, 4
        %v1292 = vshll.u32 %v1222, 16
        %v1294 = vrot.slane %v1292, 5
        %v1295 = vor.u32 %v1291, %v1294
        %v1296 = vrot.slane %v1295, 4
        %v1298 = vshll.u32 %v1223, 16
        %v1300 = vrot.slane %v1298, 5
        %v1301 = vsel %vm256, %v1296, %v1300
        %v1302 = vshrl.u32 %v1223, 16
        %v1304 = vrot.slane %v1302, 4
        %v1305 = vor.u32 %v1304, %v1300
        %v1306 = vrot.slane %v1305, 4
        %v1308 = vshll.u32 %v1224, 16
        %v1310 = vrot.slane %v1308, 5
        %v1311 = vsel %vm256, %v1306, %v1310
        %v1313 = vshrl.u32 %v1225, 16
        %v1315 = vrot.slane %v1313, 4
        %v1316 = vshll.u32 %v1225, 16
        %v1318 = vrot.slane %v1316, 5
        %v1319 = vor.u32 %v1315, %v1318
        %v1320 = vrot.slane %v1319, 4
        %v1322 = vshll.u32 %v1226, 16
        %v1324 = vrot.slane %v1322, 5
        %v1325 = vsel %vm256, %v1320, %v1324
        %v1326 = vshrl.u32 %v1226, 16
        %v1328 = vrot.slane %v1326, 4
        %v1329 = vor.u32 %v1328, %v1324
        %v1330 = vrot.slane %v1329, 4
        %v1332 = vshll.u32 %v1227, 16
        %v1334 = vrot.slane %v1332, 5
        %v1335 = vsel %vm256, %v1330, %v1334
        %v1337 = vshrl.u32 %v1228, 16
        %v1339 = vrot.slane %v1337, 4
        %v1340 = vshll.u32 %v1228, 16
        %v1342 = vrot.slane %v1340, 5
        %v1343 = vor.u32 %v1339, %v1342
        %v1344 = vrot.slane %v1343, 4
        %v1346 = vshll.u32 %v1229, 16
        %v1348 = vrot.slane %v1346, 5
        %v1349 = vsel %vm256, %v1344, %v1348
        %v1350 = vshrl.u32 %v1229, 16
        %v1352 = vrot.slane %v1350, 4
        %v1353 = vor.u32 %v1352, %v1348
        %v1354 = vrot.slane %v1353, 4
        %v1356 = vshll.u32 %v1230, 16
        %v1358 = vrot.slane %v1356, 5
        %v1359 = vsel %vm256, %v1354, %v1358
        %v1361 = vshrl.u32 %v1231, 16
        %v1363 = vrot.slane %v1361, 4
        %v1364 = vshll.u32 %v1231, 16
        %v1366 = vrot.slane %v1364, 5
        %v1367 = vor.u32 %v1363, %v1366
        %v1368 = vrot.slane %v1367, 4
        %v1370 = vshll.u32 %v1232, 16
        %v1372 = vrot.slane %v1370, 5
        %v1373 = vsel %vm256, %v1368, %v1372
        %v1374 = vshrl.u32 %v1232, 16
        %v1376 = vrot.slane %v1374, 4
        %v1377 = vor.u32 %v1376, %v1372
        %v1378 = vrot.slane %v1377, 4
        %v1380 = vshll.u32 %v1233, 16
        %v1382 = vrot.slane %v1380, 5
        %v1383 = vsel %vm256, %v1378, %v1382
        %v1385 = vshrl.u32 %v1234, 16
        %v1387 = vrot.slane %v1385, 4
        %v1388 = vshll.u32 %v1234, 16
        %v1390 = vrot.slane %v1388, 5
        %v1391 = vor.u32 %v1387, %v1390
        %v1392 = vrot.slane %v1391, 4
        %v1394 = vshll.u32 %v1235, 16
        %v1396 = vrot.slane %v1394, 5
        %v1397 = vsel %vm256, %v1392, %v1396
        %v1398 = vshrl.u32 %v1235, 16
        %v1400 = vrot.slane %v1398, 4
        %v1401 = vor.u32 %v1400, %v1396
        %v1402 = vrot.slane %v1401, 4
        %v1404 = vshll.u32 %v1236, 16
        %v1406 = vrot.slane %v1404, 5
        %v1407 = vsel %vm256, %v1402, %v1406
        %v1409 = vshrl.u32 %v1237, 16
        %v1411 = vrot.slane %v1409, 4
        %v1412 = vshll.u32 %v1237, 16
        %v1414 = vrot.slane %v1412, 5
        %v1415 = vor.u32 %v1411, %v1414
        %v1416 = vrot.slane %v1415, 4
        %v1418 = vshll.u32 %v1238, 16
        %v1420 = vrot.slane %v1418, 5
        %v1421 = vsel %vm256, %v1416, %v1420
        %v1422 = vshrl.u32 %v1238, 16
        %v1424 = vrot.slane %v1422, 4
        %v1425 = vor.u32 %v1424, %v1420
        %v1426 = vrot.slane %v1425, 4
        %v1428 = vshll.u32 %v1239, 16
        %v1430 = vrot.slane %v1428, 5
        %v1431 = vsel %vm256, %v1426, %v1430
        %s1432 = scalar_lea.vmem %s1, 16
        %v1433 = vld [vmem:[%s1432] sm:$0xf]
        %v1434 = vunpack.c.l.b16 %v1253
        %v1435 = vunpack.c.l.b16 %v1263
        %v1436 = vunpack.c.l.b16 %v1277
        %v1437 = vunpack.c.l.b16 %v1287
        %v1438 = vunpack.c.l.b16 %v1301
        %v1439 = vunpack.c.l.b16 %v1311
        %v1440 = vunpack.c.l.b16 %v1325
        %v1441 = vunpack.c.l.b16 %v1335
        %v1442 = vunpack.c.l.b16 %v1349
        %v1443 = vunpack.c.l.b16 %v1359
        %v1444 = vunpack.c.l.b16 %v1373
        %v1445 = vunpack.c.l.b16 %v1383
        %v1446 = vunpack.c.l.b16 %v1397
        %v1447 = vunpack.c.l.b16 %v1407
        %v1448 = vunpack.c.l.b16 %v1421
        %v1449 = vunpack.c.l.b16 %v1431
        %v1450 = vpack.c.b16 %v1435, %v1434
        %v1451 = vpack.c.b16 %v1437, %v1436
        %v1452 = vpack.c.b16 %v1439, %v1438
        %v1453 = vpack.c.b16 %v1441, %v1440
        %v1454 = vpack.c.b16 %v1443, %v1442
        %v1455 = vpack.c.b16 %v1445, %v1444
        %v1456 = vpack.c.b16 %v1447, %v1446
        %v1457 = vpack.c.b16 %v1449, %v1448
        %v1459 = vsel %vm475, %v1450, 0
        %v1462 = vsel %vm475, %v1451, 0
        %v1465 = vsel %vm475, %v1452, 0
        %v1468 = vsel %vm475, %v1453, 0
        %v1471 = vsel %vm475, %v1454, 0
        %v1474 = vsel %vm475, %v1455, 0
        %v1477 = vsel %vm475, %v1456, 0
        %v1480 = vsel %vm475, %v1457, 0
        %v1483 = vsel %vm500, %v1433, 0
        %1485 = vmatprep.subr.bf16.mxu0 0
        %1486 = vmatpush1.bf16.msra.mxu0 %v1483
        %1487 = vmatprep.subr.bf16.mxu0 0
        %1488 = vmatpush1.bf16.msra.mxu0 0
        %1489 = vmatprep.subr.bf16.mxu0 0
        %1490 = vmatpush1.bf16.msra.mxu0 0
        %1491 = vmatprep.subr.bf16.mxu0 0
        %1492 = vmatpush1.bf16.msra.mxu0 0
        %1493 = vmatprep.subr.bf16.mxu0 0
        %1494 = vmatpush1.bf16.msra.mxu0 0
        %1495 = vmatprep.subr.bf16.mxu0 0
        %1496 = vmatpush1.bf16.msra.mxu0 0
        %1497 = vmatprep.subr.bf16.mxu0 0
        %1498 = vmatpush1.bf16.msra.mxu0 0
        %1499 = vmatprep.subr.bf16.mxu0 0
        %1500 = vmatpush1.bf16.msra.mxu0 0
        %1501 = vmatprep.subr.bf16.mxu0 0
        %1502 = vmatpush1.bf16.msra.mxu0 0
        %1503 = vmatprep.subr.bf16.mxu0 0
        %1504 = vmatpush1.bf16.msra.mxu0 0
        %1505 = vmatprep.subr.bf16.mxu0 0
        %1506 = vmatpush1.bf16.msra.mxu0 0
        %1507 = vmatprep.subr.bf16.mxu0 0
        %1508 = vmatpush1.bf16.msra.mxu0 0
        %1509 = vmatprep.subr.bf16.mxu0 0
        %1510 = vmatpush1.bf16.msra.mxu0 0
        %1511 = vmatprep.subr.bf16.mxu0 0
        %1512 = vmatpush1.bf16.msra.mxu0 0
        %1513 = vmatprep.subr.bf16.mxu0 0
        %1514 = vmatpush1.bf16.msra.mxu0 0
        %1515 = vmatprep.subr.bf16.mxu0 0
        %1516 = vmatpush1.bf16.msra.mxu0 0
        %1517 = vmatprep.mubr.bf16.mxu0 0
        %1518 = vmatmul.mubr.bf16.gmra.mrb[0].mxu0 %v1459
        %v1519 = vpop.f32.mrb[0].mxu0
        %v1520 = vadd.f32 0.0, %v1519
        %v1521 = vpop.f32.mrb[0].mxu0
        %v1522 = vpop.f32.mrb[0].mxu0
        %v1523 = vadd.f32 0.0, %v1522
        %v1524 = vpop.f32.mrb[0].mxu0
        %1525 = vmatprep.mubr.bf16.mxu0 0
        %1526 = vmatmul.mubr.bf16.gmra.mrb[0].mxu0 %v1462
        %v1527 = vpop.f32.mrb[0].mxu0
        %v1528 = vadd.f32 0.0, %v1527
        %v1529 = vpop.f32.mrb[0].mxu0
        %v1530 = vpop.f32.mrb[0].mxu0
        %v1531 = vadd.f32 0.0, %v1530
        %v1532 = vpop.f32.mrb[0].mxu0
        %1533 = vmatprep.mubr.bf16.mxu0 0
        %1534 = vmatmul.mubr.bf16.gmra.mrb[0].mxu0 %v1465
        %v1535 = vpop.f32.mrb[0].mxu0
        %v1536 = vadd.f32 0.0, %v1535
        %v1537 = vpop.f32.mrb[0].mxu0
        %v1538 = vpop.f32.mrb[0].mxu0
        %v1539 = vadd.f32 0.0, %v1538
        %v1540 = vpop.f32.mrb[0].mxu0
        %1541 = vmatprep.mubr.bf16.mxu0 0
        %1542 = vmatmul.mubr.bf16.gmra.mrb[0].mxu0 %v1468
        %v1543 = vpop.f32.mrb[0].mxu0
        %v1544 = vadd.f32 0.0, %v1543
        %v1545 = vpop.f32.mrb[0].mxu0
        %v1546 = vpop.f32.mrb[0].mxu0
        %v1547 = vadd.f32 0.0, %v1546
        %v1548 = vpop.f32.mrb[0].mxu0
        %1549 = vmatprep.mubr.bf16.mxu0 0
        %1550 = vmatmul.mubr.bf16.gmra.mrb[0].mxu0 %v1471
        %v1551 = vpop.f32.mrb[0].mxu0
        %v1552 = vadd.f32 0.0, %v1551
        %v1553 = vpop.f32.mrb[0].mxu0
        %v1554 = vpop.f32.mrb[0].mxu0
        %v1555 = vadd.f32 0.0, %v1554
        %v1556 = vpop.f32.mrb[0].mxu0
        %1557 = vmatprep.mubr.bf16.mxu0 0
        %1558 = vmatmul.mubr.bf16.gmra.mrb[0].mxu0 %v1474
        %v1559 = vpop.f32.mrb[0].mxu0
        %v1560 = vadd.f32 0.0, %v1559
        %v1561 = vpop.f32.mrb[0].mxu0
        %v1562 = vpop.f32.mrb[0].mxu0
        %v1563 = vadd.f32 0.0, %v1562
        %v1564 = vpop.f32.mrb[0].mxu0
        %1565 = vmatprep.mubr.bf16.mxu0 0
        %1566 = vmatmul.mubr.bf16.gmra.mrb[0].mxu0 %v1477
        %v1567 = vpop.f32.mrb[0].mxu0
        %v1568 = vadd.f32 0.0, %v1567
        %v1569 = vpop.f32.mrb[0].mxu0
        %v1570 = vpop.f32.mrb[0].mxu0
        %v1571 = vadd.f32 0.0, %v1570
        %v1572 = vpop.f32.mrb[0].mxu0
        %1573 = vmatprep.mubr.bf16.mxu0 0
        %1574 = vmatmul.mubr.bf16.gmra.mrb[0].mxu0 %v1480
        %v1575 = vpop.f32.mrb[0].mxu0
        %v1576 = vadd.f32 0.0, %v1575
        %v1577 = vpop.f32.mrb[0].mxu0
        %v1578 = vpop.f32.mrb[0].mxu0
        %v1579 = vadd.f32 0.0, %v1578
        %v1580 = vpop.f32.mrb[0].mxu0
        %1581 = vdwg.mxu0
        %v1582 = vadd.f32 %v1200, %v1520
        %v1583 = vadd.f32 %v1201, %v1523
        %v1584 = vadd.f32 %v1202, %v1528
        %v1585 = vadd.f32 %v1203, %v1531
        %v1586 = vadd.f32 %v1204, %v1536
        %v1587 = vadd.f32 %v1205, %v1539
        %v1588 = vadd.f32 %v1206, %v1544
        %v1589 = vadd.f32 %v1207, %v1547
        %v1590 = vadd.f32 %v1208, %v1552
        %v1591 = vadd.f32 %v1209, %v1555
        %v1592 = vadd.f32 %v1210, %v1560
        %v1593 = vadd.f32 %v1211, %v1563
        %v1594 = vadd.f32 %v1212, %v1568
        %v1595 = vadd.f32 %v1213, %v1571
        %v1596 = vadd.f32 %v1214, %v1576
        %v1597 = vadd.f32 %v1215, %v1579
        %v1598 = vld [vmem:[%s1017] sm:$0xe]
        %v1599 = vld [vmem:[%s1017 + $0xc] sm:$0xe]
        %v1600 = vld [vmem:[%s1017 + $0x18] sm:$0xe]
        %v1601 = vld [vmem:[%s1017 + $0x24] sm:$0xe]
        %v1602 = vld [vmem:[%s1017 + $0x30] sm:$0xe]
        %v1603 = vld [vmem:[%s1017 + $0x3c] sm:$0xe]
        %v1604 = vld [vmem:[%s1017 + $0x48] sm:$0xe]
        %v1605 = vld [vmem:[%s1017 + $0x54] sm:$0xe]
        %v1630 = vrot.slane %v1598, 5
        %v1631 = vrot.slane %v1630, 4
        %v1632 = vrot.slane %v1217, 5
        %v1633 = vsel %vm791, %v1631, %v1632
        %v1634 = vrot.slane %v1632, 4
        %v1635 = vrot.slane %v1218, 5
        %v1636 = vsel %vm791, %v1634, %v1635
        %v1637 = vrot.slane %v1599, 5
        %v1638 = vrot.slane %v1637, 4
        %v1639 = vrot.slane %v1220, 5
        %v1640 = vsel %vm791, %v1638, %v1639
        %v1641 = vrot.slane %v1639, 4
        %v1642 = vrot.slane %v1221, 5
        %v1643 = vsel %vm791, %v1641, %v1642
        %v1644 = vrot.slane %v1600, 5
        %v1645 = vrot.slane %v1644, 4
        %v1646 = vrot.slane %v1223, 5
        %v1647 = vsel %vm791, %v1645, %v1646
        %v1648 = vrot.slane %v1646, 4
        %v1649 = vrot.slane %v1224, 5
        %v1650 = vsel %vm791, %v1648, %v1649
        %v1651 = vrot.slane %v1601, 5
        %v1652 = vrot.slane %v1651, 4
        %v1653 = vrot.slane %v1226, 5
        %v1654 = vsel %vm791, %v1652, %v1653
        %v1655 = vrot.slane %v1653, 4
        %v1656 = vrot.slane %v1227, 5
        %v1657 = vsel %vm791, %v1655, %v1656
        %v1658 = vrot.slane %v1602, 5
        %v1659 = vrot.slane %v1658, 4
        %v1660 = vrot.slane %v1229, 5
        %v1661 = vsel %vm791, %v1659, %v1660
        %v1662 = vrot.slane %v1660, 4
        %v1663 = vrot.slane %v1230, 5
        %v1664 = vsel %vm791, %v1662, %v1663
        %v1665 = vrot.slane %v1603, 5
        %v1666 = vrot.slane %v1665, 4
        %v1667 = vrot.slane %v1232, 5
        %v1668 = vsel %vm791, %v1666, %v1667
        %v1669 = vrot.slane %v1667, 4
        %v1670 = vrot.slane %v1233, 5
        %v1671 = vsel %vm791, %v1669, %v1670
        %v1672 = vrot.slane %v1604, 5
        %v1673 = vrot.slane %v1672, 4
        %v1674 = vrot.slane %v1235, 5
        %v1675 = vsel %vm791, %v1673, %v1674
        %v1676 = vrot.slane %v1674, 4
        %v1677 = vrot.slane %v1236, 5
        %v1678 = vsel %vm791, %v1676, %v1677
        %v1679 = vrot.slane %v1605, 5
        %v1680 = vrot.slane %v1679, 4
        %v1681 = vrot.slane %v1238, 5
        %v1682 = vsel %vm791, %v1680, %v1681
        %v1683 = vrot.slane %v1681, 4
        %v1684 = vrot.slane %v1239, 5
        %v1685 = vsel %vm791, %v1683, %v1684
        %s1686 = scalar_lea.vmem %s1, 20
        %v1687 = vld [vmem:[%s1686] sm:$0xf]
        %v1688 = vunpack.c.l.b16 %v1633
        %v1689 = vunpack.c.l.b16 %v1636
        %v1690 = vunpack.c.l.b16 %v1640
        %v1691 = vunpack.c.l.b16 %v1643
        %v1692 = vunpack.c.l.b16 %v1647
        %v1693 = vunpack.c.l.b16 %v1650
        %v1694 = vunpack.c.l.b16 %v1654
        %v1695 = vunpack.c.l.b16 %v1657
        %v1696 = vunpack.c.l.b16 %v1661
        %v1697 = vunpack.c.l.b16 %v1664
        %v1698 = vunpack.c.l.b16 %v1668
        %v1699 = vunpack.c.l.b16 %v1671
        %v1700 = vunpack.c.l.b16 %v1675
        %v1701 = vunpack.c.l.b16 %v1678
        %v1702 = vunpack.c.l.b16 %v1682
        %v1703 = vunpack.c.l.b16 %v1685
        %v1704 = vpack.c.b16 %v1689, %v1688
        %v1705 = vpack.c.b16 %v1691, %v1690
        %v1706 = vpack.c.b16 %v1693, %v1692
        %v1707 = vpack.c.b16 %v1695, %v1694
        %v1708 = vpack.c.b16 %v1697, %v1696
        %v1709 = vpack.c.b16 %v1699, %v1698
        %v1710 = vpack.c.b16 %v1701, %v1700
        %v1711 = vpack.c.b16 %v1703, %v1702
        %v1713 = vsel %vm475, %v1704, 0
        %v1716 = vsel %vm475, %v1705, 0
        %v1719 = vsel %vm475, %v1706, 0
        %v1722 = vsel %vm475, %v1707, 0
        %v1725 = vsel %vm475, %v1708, 0
        %v1728 = vsel %vm475, %v1709, 0
        %v1731 = vsel %vm475, %v1710, 0
        %v1734 = vsel %vm475, %v1711, 0
        %v1737 = vsel %vm500, %v1687, 0
        %1739 = vmatprep.subr.bf16.mxu0 0
        %1740 = vmatpush1.bf16.msra.mxu0 %v1737
        %1741 = vmatprep.subr.bf16.mxu0 0
        %1742 = vmatpush1.bf16.msra.mxu0 0
        %1743 = vmatprep.subr.bf16.mxu0 0
        %1744 = vmatpush1.bf16.msra.mxu0 0
        %1745 = vmatprep.subr.bf16.mxu0 0
        %1746 = vmatpush1.bf16.msra.mxu0 0
        %1747 = vmatprep.subr.bf16.mxu0 0
        %1748 = vmatpush1.bf16.msra.mxu0 0
        %1749 = vmatprep.subr.bf16.mxu0 0
        %1750 = vmatpush1.bf16.msra.mxu0 0
        %1751 = vmatprep.subr.bf16.mxu0 0
        %1752 = vmatpush1.bf16.msra.mxu0 0
        %1753 = vmatprep.subr.bf16.mxu0 0
        %1754 = vmatpush1.bf16.msra.mxu0 0
        %1755 = vmatprep.subr.bf16.mxu0 0
        %1756 = vmatpush1.bf16.msra.mxu0 0
        %1757 = vmatprep.subr.bf16.mxu0 0
        %1758 = vmatpush1.bf16.msra.mxu0 0
        %1759 = vmatprep.subr.bf16.mxu0 0
        %1760 = vmatpush1.bf16.msra.mxu0 0
        %1761 = vmatprep.subr.bf16.mxu0 0
        %1762 = vmatpush1.bf16.msra.mxu0 0
        %1763 = vmatprep.subr.bf16.mxu0 0
        %1764 = vmatpush1.bf16.msra.mxu0 0
        %1765 = vmatprep.subr.bf16.mxu0 0
        %1766 = vmatpush1.bf16.msra.mxu0 0
        %1767 = vmatprep.subr.bf16.mxu0 0
        %1768 = vmatpush1.bf16.msra.mxu0 0
        %1769 = vmatprep.subr.bf16.mxu0 0
        %1770 = vmatpush1.bf16.msra.mxu0 0
        %1771 = vmatprep.mubr.bf16.mxu0 0
        %1772 = vmatmul.mubr.bf16.gmra.mrb[0].mxu0 %v1713
        %v1773 = vpop.f32.mrb[0].mxu0
        %v1774 = vadd.f32 0.0, %v1773
        %v1775 = vpop.f32.mrb[0].mxu0
        %v1776 = vpop.f32.mrb[0].mxu0
        %v1777 = vadd.f32 0.0, %v1776
        %v1778 = vpop.f32.mrb[0].mxu0
        %1779 = vmatprep.mubr.bf16.mxu0 0
        %1780 = vmatmul.mubr.bf16.gmra.mrb[0].mxu0 %v1716
        %v1781 = vpop.f32.mrb[0].mxu0
        %v1782 = vadd.f32 0.0, %v1781
        %v1783 = vpop.f32.mrb[0].mxu0
        %v1784 = vpop.f32.mrb[0].mxu0
        %v1785 = vadd.f32 0.0, %v1784
        %v1786 = vpop.f32.mrb[0].mxu0
        %1787 = vmatprep.mubr.bf16.mxu0 0
        %1788 = vmatmul.mubr.bf16.gmra.mrb[0].mxu0 %v1719
        %v1789 = vpop.f32.mrb[0].mxu0
        %v1790 = vadd.f32 0.0, %v1789
        %v1791 = vpop.f32.mrb[0].mxu0
        %v1792 = vpop.f32.mrb[0].mxu0
        %v1793 = vadd.f32 0.0, %v1792
        %v1794 = vpop.f32.mrb[0].mxu0
        %1795 = vmatprep.mubr.bf16.mxu0 0
        %1796 = vmatmul.mubr.bf16.gmra.mrb[0].mxu0 %v1722
        %v1797 = vpop.f32.mrb[0].mxu0
        %v1798 = vadd.f32 0.0, %v1797
        %v1799 = vpop.f32.mrb[0].mxu0
        %v1800 = vpop.f32.mrb[0].mxu0
        %v1801 = vadd.f32 0.0, %v1800
        %v1802 = vpop.f32.mrb[0].mxu0
        %1803 = vmatprep.mubr.bf16.mxu0 0
        %1804 = vmatmul.mubr.bf16.gmra.mrb[0].mxu0 %v1725
        %v1805 = vpop.f32.mrb[0].mxu0
        %v1806 = vadd.f32 0.0, %v1805
        %v1807 = vpop.f32.mrb[0].mxu0
        %v1808 = vpop.f32.mrb[0].mxu0
        %v1809 = vadd.f32 0.0, %v1808
        %v1810 = vpop.f32.mrb[0].mxu0
        %1811 = vmatprep.mubr.bf16.mxu0 0
        %1812 = vmatmul.mubr.bf16.gmra.mrb[0].mxu0 %v1728
        %v1813 = vpop.f32.mrb[0].mxu0
        %v1814 = vadd.f32 0.0, %v1813
        %v1815 = vpop.f32.mrb[0].mxu0
        %v1816 = vpop.f32.mrb[0].mxu0
        %v1817 = vadd.f32 0.0, %v1816
        %v1818 = vpop.f32.mrb[0].mxu0
        %1819 = vmatprep.mubr.bf16.mxu0 0
        %1820 = vmatmul.mubr.bf16.gmra.mrb[0].mxu0 %v1731
        %v1821 = vpop.f32.mrb[0].mxu0
        %v1822 = vadd.f32 0.0, %v1821
        %v1823 = vpop.f32.mrb[0].mxu0
        %v1824 = vpop.f32.mrb[0].mxu0
        %v1825 = vadd.f32 0.0, %v1824
        %v1826 = vpop.f32.mrb[0].mxu0
        %1827 = vmatprep.mubr.bf16.mxu0 0
        %1828 = vmatmul.mubr.bf16.gmra.mrb[0].mxu0 %v1734
        %v1829 = vpop.f32.mrb[0].mxu0
        %v1830 = vadd.f32 0.0, %v1829
        %v1831 = vpop.f32.mrb[0].mxu0
        %v1832 = vpop.f32.mrb[0].mxu0
        %v1833 = vadd.f32 0.0, %v1832
        %v1834 = vpop.f32.mrb[0].mxu0
        %1835 = vdwg.mxu0
        %v1836 = vadd.f32 %v1582, %v1774
        %v1837 = vadd.f32 %v1583, %v1777
        %v1838 = vadd.f32 %v1584, %v1782
        %v1839 = vadd.f32 %v1585, %v1785
        %v1840 = vadd.f32 %v1586, %v1790
        %v1841 = vadd.f32 %v1587, %v1793
        %v1842 = vadd.f32 %v1588, %v1798
        %v1843 = vadd.f32 %v1589, %v1801
        %v1844 = vadd.f32 %v1590, %v1806
        %v1845 = vadd.f32 %v1591, %v1809
        %v1846 = vadd.f32 %v1592, %v1814
        %v1847 = vadd.f32 %v1593, %v1817
        %v1848 = vadd.f32 %v1594, %v1822
        %v1849 = vadd.f32 %v1595, %v1825
        %v1850 = vadd.f32 %v1596, %v1830
        %v1851 = vadd.f32 %v1597, %v1833
        %s1852 = sadd.s32 %s225, 2
        %s1853 = smul.u32 %s1852, 3
        %s1854 = smul.addr %s1853, 4
        %s1855 = scalar_lea.vmem %s222, %s1854
        %v1856 = vld [vmem:[%s1855] sm:$0xf]
        %v1857 = vld [vmem:[%s1855 + $0x4] sm:$0xf]
        %v1858 = vld [vmem:[%s1855 + $0xc] sm:$0xf]
        %v1859 = vld [vmem:[%s1855 + $0x10] sm:$0xf]
        %v1860 = vld [vmem:[%s1855 + $0x18] sm:$0xf]
        %v1861 = vld [vmem:[%s1855 + $0x1c] sm:$0xf]
        %v1862 = vld [vmem:[%s1855 + $0x24] sm:$0xf]
        %v1863 = vld [vmem:[%s1855 + $0x28] sm:$0xf]
        %v1864 = vld [vmem:[%s1855 + $0x30] sm:$0xf]
        %v1865 = vld [vmem:[%s1855 + $0x34] sm:$0xf]
        %v1866 = vld [vmem:[%s1855 + $0x3c] sm:$0xf]
        %v1867 = vld [vmem:[%s1855 + $0x40] sm:$0xf]
        %v1868 = vld [vmem:[%s1855 + $0x48] sm:$0xf]
        %v1869 = vld [vmem:[%s1855 + $0x4c] sm:$0xf]
        %v1870 = vld [vmem:[%s1855 + $0x54] sm:$0xf]
        %v1871 = vld [vmem:[%s1855 + $0x58] sm:$0xf]
        %s1872 = scalar_lea.vmem %s1, 24
        %v1873 = vld [vmem:[%s1872] sm:$0xf]
        %v1890 = vunpack.c.l.b16 %v1856
        %v1891 = vunpack.c.l.b16 %v1857
        %v1892 = vunpack.c.l.b16 %v1858
        %v1893 = vunpack.c.l.b16 %v1859
        %v1894 = vunpack.c.l.b16 %v1860
        %v1895 = vunpack.c.l.b16 %v1861
        %v1896 = vunpack.c.l.b16 %v1862
        %v1897 = vunpack.c.l.b16 %v1863
        %v1898 = vunpack.c.l.b16 %v1864
        %v1899 = vunpack.c.l.b16 %v1865
        %v1900 = vunpack.c.l.b16 %v1866
        %v1901 = vunpack.c.l.b16 %v1867
        %v1902 = vunpack.c.l.b16 %v1868
        %v1903 = vunpack.c.l.b16 %v1869
        %v1904 = vunpack.c.l.b16 %v1870
        %v1905 = vunpack.c.l.b16 %v1871
        %v1906 = vpack.c.b16 %v1891, %v1890
        %v1907 = vpack.c.b16 %v1893, %v1892
        %v1908 = vpack.c.b16 %v1895, %v1894
        %v1909 = vpack.c.b16 %v1897, %v1896
        %v1910 = vpack.c.b16 %v1899, %v1898
        %v1911 = vpack.c.b16 %v1901, %v1900
        %v1912 = vpack.c.b16 %v1903, %v1902
        %v1913 = vpack.c.b16 %v1905, %v1904
        %v1915 = vsel %vm475, %v1906, 0
        %v1918 = vsel %vm475, %v1907, 0
        %v1921 = vsel %vm475, %v1908, 0
        %v1924 = vsel %vm475, %v1909, 0
        %v1927 = vsel %vm475, %v1910, 0
        %v1930 = vsel %vm475, %v1911, 0
        %v1933 = vsel %vm475, %v1912, 0
        %v1936 = vsel %vm475, %v1913, 0
        %v1939 = vsel %vm500, %v1873, 0
        %1941 = vmatprep.subr.bf16.mxu0 0
        %1942 = vmatpush1.bf16.msra.mxu0 %v1939
        %1943 = vmatprep.subr.bf16.mxu0 0
        %1944 = vmatpush1.bf16.msra.mxu0 0
        %1945 = vmatprep.subr.bf16.mxu0 0
        %1946 = vmatpush1.bf16.msra.mxu0 0
        %1947 = vmatprep.subr.bf16.mxu0 0
        %1948 = vmatpush1.bf16.msra.mxu0 0
        %1949 = vmatprep.subr.bf16.mxu0 0
        %1950 = vmatpush1.bf16.msra.mxu0 0
        %1951 = vmatprep.subr.bf16.mxu0 0
        %1952 = vmatpush1.bf16.msra.mxu0 0
        %1953 = vmatprep.subr.bf16.mxu0 0
        %1954 = vmatpush1.bf16.msra.mxu0 0
        %1955 = vmatprep.subr.bf16.mxu0 0
        %1956 = vmatpush1.bf16.msra.mxu0 0
        %1957 = vmatprep.subr.bf16.mxu0 0
        %1958 = vmatpush1.bf16.msra.mxu0 0
        %1959 = vmatprep.subr.bf16.mxu0 0
        %1960 = vmatpush1.bf16.msra.mxu0 0
        %1961 = vmatprep.subr.bf16.mxu0 0
        %1962 = vmatpush1.bf16.msra.mxu0 0
        %1963 = vmatprep.subr.bf16.mxu0 0
        %1964 = vmatpush1.bf16.msra.mxu0 0
        %1965 = vmatprep.subr.bf16.mxu0 0
        %1966 = vmatpush1.bf16.msra.mxu0 0
        %1967 = vmatprep.subr.bf16.mxu0 0
        %1968 = vmatpush1.bf16.msra.mxu0 0
        %1969 = vmatprep.subr.bf16.mxu0 0
        %1970 = vmatpush1.bf16.msra.mxu0 0
        %1971 = vmatprep.subr.bf16.mxu0 0
        %1972 = vmatpush1.bf16.msra.mxu0 0
        %1973 = vmatprep.mubr.bf16.mxu0 0
        %1974 = vmatmul.mubr.bf16.gmra.mrb[0].mxu0 %v1915
        %v1975 = vpop.f32.mrb[0].mxu0
        %v1976 = vadd.f32 0.0, %v1975
        %v1977 = vpop.f32.mrb[0].mxu0
        %v1978 = vpop.f32.mrb[0].mxu0
        %v1979 = vadd.f32 0.0, %v1978
        %v1980 = vpop.f32.mrb[0].mxu0
        %1981 = vmatprep.mubr.bf16.mxu0 0
        %1982 = vmatmul.mubr.bf16.gmra.mrb[0].mxu0 %v1918
        %v1983 = vpop.f32.mrb[0].mxu0
        %v1984 = vadd.f32 0.0, %v1983
        %v1985 = vpop.f32.mrb[0].mxu0
        %v1986 = vpop.f32.mrb[0].mxu0
        %v1987 = vadd.f32 0.0, %v1986
        %v1988 = vpop.f32.mrb[0].mxu0
        %1989 = vmatprep.mubr.bf16.mxu0 0
        %1990 = vmatmul.mubr.bf16.gmra.mrb[0].mxu0 %v1921
        %v1991 = vpop.f32.mrb[0].mxu0
        %v1992 = vadd.f32 0.0, %v1991
        %v1993 = vpop.f32.mrb[0].mxu0
        %v1994 = vpop.f32.mrb[0].mxu0
        %v1995 = vadd.f32 0.0, %v1994
        %v1996 = vpop.f32.mrb[0].mxu0
        %1997 = vmatprep.mubr.bf16.mxu0 0
        %1998 = vmatmul.mubr.bf16.gmra.mrb[0].mxu0 %v1924
        %v1999 = vpop.f32.mrb[0].mxu0
        %v2000 = vadd.f32 0.0, %v1999
        %v2001 = vpop.f32.mrb[0].mxu0
        %v2002 = vpop.f32.mrb[0].mxu0
        %v2003 = vadd.f32 0.0, %v2002
        %v2004 = vpop.f32.mrb[0].mxu0
        %2005 = vmatprep.mubr.bf16.mxu0 0
        %2006 = vmatmul.mubr.bf16.gmra.mrb[0].mxu0 %v1927
        %v2007 = vpop.f32.mrb[0].mxu0
        %v2008 = vadd.f32 0.0, %v2007
        %v2009 = vpop.f32.mrb[0].mxu0
        %v2010 = vpop.f32.mrb[0].mxu0
        %v2011 = vadd.f32 0.0, %v2010
        %v2012 = vpop.f32.mrb[0].mxu0
        %2013 = vmatprep.mubr.bf16.mxu0 0
        %2014 = vmatmul.mubr.bf16.gmra.mrb[0].mxu0 %v1930
        %v2015 = vpop.f32.mrb[0].mxu0
        %v2016 = vadd.f32 0.0, %v2015
        %v2017 = vpop.f32.mrb[0].mxu0
        %v2018 = vpop.f32.mrb[0].mxu0
        %v2019 = vadd.f32 0.0, %v2018
        %v2020 = vpop.f32.mrb[0].mxu0
        %2021 = vmatprep.mubr.bf16.mxu0 0
        %2022 = vmatmul.mubr.bf16.gmra.mrb[0].mxu0 %v1933
        %v2023 = vpop.f32.mrb[0].mxu0
        %v2024 = vadd.f32 0.0, %v2023
        %v2025 = vpop.f32.mrb[0].mxu0
        %v2026 = vpop.f32.mrb[0].mxu0
        %v2027 = vadd.f32 0.0, %v2026
        %v2028 = vpop.f32.mrb[0].mxu0
        %2029 = vmatprep.mubr.bf16.mxu0 0
        %2030 = vmatmul.mubr.bf16.gmra.mrb[0].mxu0 %v1936
        %v2031 = vpop.f32.mrb[0].mxu0
        %v2032 = vadd.f32 0.0, %v2031
        %v2033 = vpop.f32.mrb[0].mxu0
        %v2034 = vpop.f32.mrb[0].mxu0
        %v2035 = vadd.f32 0.0, %v2034
        %v2036 = vpop.f32.mrb[0].mxu0
        %2037 = vdwg.mxu0
        %v2038 = vadd.f32 %v1836, %v1976
        %v2039 = vadd.f32 %v1837, %v1979
        %v2040 = vadd.f32 %v1838, %v1984
        %v2041 = vadd.f32 %v1839, %v1987
        %v2042 = vadd.f32 %v1840, %v1992
        %v2043 = vadd.f32 %v1841, %v1995
        %v2044 = vadd.f32 %v1842, %v2000
        %v2045 = vadd.f32 %v1843, %v2003
        %v2046 = vadd.f32 %v1844, %v2008
        %v2047 = vadd.f32 %v1845, %v2011
        %v2048 = vadd.f32 %v1846, %v2016
        %v2049 = vadd.f32 %v1847, %v2019
        %v2050 = vadd.f32 %v1848, %v2024
        %v2051 = vadd.f32 %v1849, %v2027
        %v2052 = vadd.f32 %v1850, %v2032
        %v2053 = vadd.f32 %v1851, %v2035
        %v2054 = vld [vmem:[%s1855] sm:$0xf]
        %v2055 = vld [vmem:[%s1855 + $0x4] sm:$0xf]
        %v2056 = vld [vmem:[%s1855 + $0x8] sm:$0x1]
        %v2057 = vld [vmem:[%s1855 + $0xc] sm:$0xf]
        %v2058 = vld [vmem:[%s1855 + $0x10] sm:$0xf]
        %v2059 = vld [vmem:[%s1855 + $0x14] sm:$0x1]
        %v2060 = vld [vmem:[%s1855 + $0x18] sm:$0xf]
        %v2061 = vld [vmem:[%s1855 + $0x1c] sm:$0xf]
        %v2062 = vld [vmem:[%s1855 + $0x20] sm:$0x1]
        %v2063 = vld [vmem:[%s1855 + $0x24] sm:$0xf]
        %v2064 = vld [vmem:[%s1855 + $0x28] sm:$0xf]
        %v2065 = vld [vmem:[%s1855 + $0x2c] sm:$0x1]
        %v2066 = vld [vmem:[%s1855 + $0x30] sm:$0xf]
        %v2067 = vld [vmem:[%s1855 + $0x34] sm:$0xf]
        %v2068 = vld [vmem:[%s1855 + $0x38] sm:$0x1]
        %v2069 = vld [vmem:[%s1855 + $0x3c] sm:$0xf]
        %v2070 = vld [vmem:[%s1855 + $0x40] sm:$0xf]
        %v2071 = vld [vmem:[%s1855 + $0x44] sm:$0x1]
        %v2072 = vld [vmem:[%s1855 + $0x48] sm:$0xf]
        %v2073 = vld [vmem:[%s1855 + $0x4c] sm:$0xf]
        %v2074 = vld [vmem:[%s1855 + $0x50] sm:$0x1]
        %v2075 = vld [vmem:[%s1855 + $0x54] sm:$0xf]
        %v2076 = vld [vmem:[%s1855 + $0x58] sm:$0xf]
        %v2077 = vld [vmem:[%s1855 + $0x5c] sm:$0x1]
        %v2079 = vshrl.u32 %v2054, 16
        %v2081 = vrot.slane %v2079, 4
        %v2082 = vshll.u32 %v2054, 16
        %v2084 = vrot.slane %v2082, 5
        %v2085 = vor.u32 %v2081, %v2084
        %v2086 = vrot.slane %v2085, 4
        %v2088 = vshll.u32 %v2055, 16
        %v2090 = vrot.slane %v2088, 5
        %v2091 = vsel %vm256, %v2086, %v2090
        %v2092 = vshrl.u32 %v2055, 16
        %v2094 = vrot.slane %v2092, 4
        %v2095 = vor.u32 %v2094, %v2090
        %v2096 = vrot.slane %v2095, 4
        %v2098 = vshll.u32 %v2056, 16
        %v2100 = vrot.slane %v2098, 5
        %v2101 = vsel %vm256, %v2096, %v2100
        %v2103 = vshrl.u32 %v2057, 16
        %v2105 = vrot.slane %v2103, 4
        %v2106 = vshll.u32 %v2057, 16
        %v2108 = vrot.slane %v2106, 5
        %v2109 = vor.u32 %v2105, %v2108
        %v2110 = vrot.slane %v2109, 4
        %v2112 = vshll.u32 %v2058, 16
        %v2114 = vrot.slane %v2112, 5
        %v2115 = vsel %vm256, %v2110, %v2114
        %v2116 = vshrl.u32 %v2058, 16
        %v2118 = vrot.slane %v2116, 4
        %v2119 = vor.u32 %v2118, %v2114
        %v2120 = vrot.slane %v2119, 4
        %v2122 = vshll.u32 %v2059, 16
        %v2124 = vrot.slane %v2122, 5
        %v2125 = vsel %vm256, %v2120, %v2124
        %v2127 = vshrl.u32 %v2060, 16
        %v2129 = vrot.slane %v2127, 4
        %v2130 = vshll.u32 %v2060, 16
        %v2132 = vrot.slane %v2130, 5
        %v2133 = vor.u32 %v2129, %v2132
        %v2134 = vrot.slane %v2133, 4
        %v2136 = vshll.u32 %v2061, 16
        %v2138 = vrot.slane %v2136, 5
        %v2139 = vsel %vm256, %v2134, %v2138
        %v2140 = vshrl.u32 %v2061, 16
        %v2142 = vrot.slane %v2140, 4
        %v2143 = vor.u32 %v2142, %v2138
        %v2144 = vrot.slane %v2143, 4
        %v2146 = vshll.u32 %v2062, 16
        %v2148 = vrot.slane %v2146, 5
        %v2149 = vsel %vm256, %v2144, %v2148
        %v2151 = vshrl.u32 %v2063, 16
        %v2153 = vrot.slane %v2151, 4
        %v2154 = vshll.u32 %v2063, 16
        %v2156 = vrot.slane %v2154, 5
        %v2157 = vor.u32 %v2153, %v2156
        %v2158 = vrot.slane %v2157, 4
        %v2160 = vshll.u32 %v2064, 16
        %v2162 = vrot.slane %v2160, 5
        %v2163 = vsel %vm256, %v2158, %v2162
        %v2164 = vshrl.u32 %v2064, 16
        %v2166 = vrot.slane %v2164, 4
        %v2167 = vor.u32 %v2166, %v2162
        %v2168 = vrot.slane %v2167, 4
        %v2170 = vshll.u32 %v2065, 16
        %v2172 = vrot.slane %v2170, 5
        %v2173 = vsel %vm256, %v2168, %v2172
        %v2175 = vshrl.u32 %v2066, 16
        %v2177 = vrot.slane %v2175, 4
        %v2178 = vshll.u32 %v2066, 16
        %v2180 = vrot.slane %v2178, 5
        %v2181 = vor.u32 %v2177, %v2180
        %v2182 = vrot.slane %v2181, 4
        %v2184 = vshll.u32 %v2067, 16
        %v2186 = vrot.slane %v2184, 5
        %v2187 = vsel %vm256, %v2182, %v2186
        %v2188 = vshrl.u32 %v2067, 16
        %v2190 = vrot.slane %v2188, 4
        %v2191 = vor.u32 %v2190, %v2186
        %v2192 = vrot.slane %v2191, 4
        %v2194 = vshll.u32 %v2068, 16
        %v2196 = vrot.slane %v2194, 5
        %v2197 = vsel %vm256, %v2192, %v2196
        %v2199 = vshrl.u32 %v2069, 16
        %v2201 = vrot.slane %v2199, 4
        %v2202 = vshll.u32 %v2069, 16
        %v2204 = vrot.slane %v2202, 5
        %v2205 = vor.u32 %v2201, %v2204
        %v2206 = vrot.slane %v2205, 4
        %v2208 = vshll.u32 %v2070, 16
        %v2210 = vrot.slane %v2208, 5
        %v2211 = vsel %vm256, %v2206, %v2210
        %v2212 = vshrl.u32 %v2070, 16
        %v2214 = vrot.slane %v2212, 4
        %v2215 = vor.u32 %v2214, %v2210
        %v2216 = vrot.slane %v2215, 4
        %v2218 = vshll.u32 %v2071, 16
        %v2220 = vrot.slane %v2218, 5
        %v2221 = vsel %vm256, %v2216, %v2220
        %v2223 = vshrl.u32 %v2072, 16
        %v2225 = vrot.slane %v2223, 4
        %v2226 = vshll.u32 %v2072, 16
        %v2228 = vrot.slane %v2226, 5
        %v2229 = vor.u32 %v2225, %v2228
        %v2230 = vrot.slane %v2229, 4
        %v2232 = vshll.u32 %v2073, 16
        %v2234 = vrot.slane %v2232, 5
        %v2235 = vsel %vm256, %v2230, %v2234
        %v2236 = vshrl.u32 %v2073, 16
        %v2238 = vrot.slane %v2236, 4
        %v2239 = vor.u32 %v2238, %v2234
        %v2240 = vrot.slane %v2239, 4
        %v2242 = vshll.u32 %v2074, 16
        %v2244 = vrot.slane %v2242, 5
        %v2245 = vsel %vm256, %v2240, %v2244
        %v2247 = vshrl.u32 %v2075, 16
        %v2249 = vrot.slane %v2247, 4
        %v2250 = vshll.u32 %v2075, 16
        %v2252 = vrot.slane %v2250, 5
        %v2253 = vor.u32 %v2249, %v2252
        %v2254 = vrot.slane %v2253, 4
        %v2256 = vshll.u32 %v2076, 16
        %v2258 = vrot.slane %v2256, 5
        %v2259 = vsel %vm256, %v2254, %v2258
        %v2260 = vshrl.u32 %v2076, 16
        %v2262 = vrot.slane %v2260, 4
        %v2263 = vor.u32 %v2262, %v2258
        %v2264 = vrot.slane %v2263, 4
        %v2266 = vshll.u32 %v2077, 16
        %v2268 = vrot.slane %v2266, 5
        %v2269 = vsel %vm256, %v2264, %v2268
        %s2270 = scalar_lea.vmem %s1, 28
        %v2271 = vld [vmem:[%s2270] sm:$0xf]
        %v2272 = vunpack.c.l.b16 %v2091
        %v2273 = vunpack.c.l.b16 %v2101
        %v2274 = vunpack.c.l.b16 %v2115
        %v2275 = vunpack.c.l.b16 %v2125
        %v2276 = vunpack.c.l.b16 %v2139
        %v2277 = vunpack.c.l.b16 %v2149
        %v2278 = vunpack.c.l.b16 %v2163
        %v2279 = vunpack.c.l.b16 %v2173
        %v2280 = vunpack.c.l.b16 %v2187
        %v2281 = vunpack.c.l.b16 %v2197
        %v2282 = vunpack.c.l.b16 %v2211
        %v2283 = vunpack.c.l.b16 %v2221
        %v2284 = vunpack.c.l.b16 %v2235
        %v2285 = vunpack.c.l.b16 %v2245
        %v2286 = vunpack.c.l.b16 %v2259
        %v2287 = vunpack.c.l.b16 %v2269
        %v2288 = vpack.c.b16 %v2273, %v2272
        %v2289 = vpack.c.b16 %v2275, %v2274
        %v2290 = vpack.c.b16 %v2277, %v2276
        %v2291 = vpack.c.b16 %v2279, %v2278
        %v2292 = vpack.c.b16 %v2281, %v2280
        %v2293 = vpack.c.b16 %v2283, %v2282
        %v2294 = vpack.c.b16 %v2285, %v2284
        %v2295 = vpack.c.b16 %v2287, %v2286
        %v2297 = vsel %vm475, %v2288, 0
        %v2300 = vsel %vm475, %v2289, 0
        %v2303 = vsel %vm475, %v2290, 0
        %v2306 = vsel %vm475, %v2291, 0
        %v2309 = vsel %vm475, %v2292, 0
        %v2312 = vsel %vm475, %v2293, 0
        %v2315 = vsel %vm475, %v2294, 0
        %v2318 = vsel %vm475, %v2295, 0
        %v2321 = vsel %vm500, %v2271, 0
        %2323 = vmatprep.subr.bf16.mxu0 0
        %2324 = vmatpush1.bf16.msra.mxu0 %v2321
        %2325 = vmatprep.subr.bf16.mxu0 0
        %2326 = vmatpush1.bf16.msra.mxu0 0
        %2327 = vmatprep.subr.bf16.mxu0 0
        %2328 = vmatpush1.bf16.msra.mxu0 0
        %2329 = vmatprep.subr.bf16.mxu0 0
        %2330 = vmatpush1.bf16.msra.mxu0 0
        %2331 = vmatprep.subr.bf16.mxu0 0
        %2332 = vmatpush1.bf16.msra.mxu0 0
        %2333 = vmatprep.subr.bf16.mxu0 0
        %2334 = vmatpush1.bf16.msra.mxu0 0
        %2335 = vmatprep.subr.bf16.mxu0 0
        %2336 = vmatpush1.bf16.msra.mxu0 0
        %2337 = vmatprep.subr.bf16.mxu0 0
        %2338 = vmatpush1.bf16.msra.mxu0 0
        %2339 = vmatprep.subr.bf16.mxu0 0
        %2340 = vmatpush1.bf16.msra.mxu0 0
        %2341 = vmatprep.subr.bf16.mxu0 0
        %2342 = vmatpush1.bf16.msra.mxu0 0
        %2343 = vmatprep.subr.bf16.mxu0 0
        %2344 = vmatpush1.bf16.msra.mxu0 0
        %2345 = vmatprep.subr.bf16.mxu0 0
        %2346 = vmatpush1.bf16.msra.mxu0 0
        %2347 = vmatprep.subr.bf16.mxu0 0
        %2348 = vmatpush1.bf16.msra.mxu0 0
        %2349 = vmatprep.subr.bf16.mxu0 0
        %2350 = vmatpush1.bf16.msra.mxu0 0
        %2351 = vmatprep.subr.bf16.mxu0 0
        %2352 = vmatpush1.bf16.msra.mxu0 0
        %2353 = vmatprep.subr.bf16.mxu0 0
        %2354 = vmatpush1.bf16.msra.mxu0 0
        %2355 = vmatprep.mubr.bf16.mxu0 0
        %2356 = vmatmul.mubr.bf16.gmra.mrb[0].mxu0 %v2297
        %v2357 = vpop.f32.mrb[0].mxu0
        %v2358 = vadd.f32 0.0, %v2357
        %v2359 = vpop.f32.mrb[0].mxu0
        %v2360 = vpop.f32.mrb[0].mxu0
        %v2361 = vadd.f32 0.0, %v2360
        %v2362 = vpop.f32.mrb[0].mxu0
        %2363 = vmatprep.mubr.bf16.mxu0 0
        %2364 = vmatmul.mubr.bf16.gmra.mrb[0].mxu0 %v2300
        %v2365 = vpop.f32.mrb[0].mxu0
        %v2366 = vadd.f32 0.0, %v2365
        %v2367 = vpop.f32.mrb[0].mxu0
        %v2368 = vpop.f32.mrb[0].mxu0
        %v2369 = vadd.f32 0.0, %v2368
        %v2370 = vpop.f32.mrb[0].mxu0
        %2371 = vmatprep.mubr.bf16.mxu0 0
        %2372 = vmatmul.mubr.bf16.gmra.mrb[0].mxu0 %v2303
        %v2373 = vpop.f32.mrb[0].mxu0
        %v2374 = vadd.f32 0.0, %v2373
        %v2375 = vpop.f32.mrb[0].mxu0
        %v2376 = vpop.f32.mrb[0].mxu0
        %v2377 = vadd.f32 0.0, %v2376
        %v2378 = vpop.f32.mrb[0].mxu0
        %2379 = vmatprep.mubr.bf16.mxu0 0
        %2380 = vmatmul.mubr.bf16.gmra.mrb[0].mxu0 %v2306
        %v2381 = vpop.f32.mrb[0].mxu0
        %v2382 = vadd.f32 0.0, %v2381
        %v2383 = vpop.f32.mrb[0].mxu0
        %v2384 = vpop.f32.mrb[0].mxu0
        %v2385 = vadd.f32 0.0, %v2384
        %v2386 = vpop.f32.mrb[0].mxu0
        %2387 = vmatprep.mubr.bf16.mxu0 0
        %2388 = vmatmul.mubr.bf16.gmra.mrb[0].mxu0 %v2309
        %v2389 = vpop.f32.mrb[0].mxu0
        %v2390 = vadd.f32 0.0, %v2389
        %v2391 = vpop.f32.mrb[0].mxu0
        %v2392 = vpop.f32.mrb[0].mxu0
        %v2393 = vadd.f32 0.0, %v2392
        %v2394 = vpop.f32.mrb[0].mxu0
        %2395 = vmatprep.mubr.bf16.mxu0 0
        %2396 = vmatmul.mubr.bf16.gmra.mrb[0].mxu0 %v2312
        %v2397 = vpop.f32.mrb[0].mxu0
        %v2398 = vadd.f32 0.0, %v2397
        %v2399 = vpop.f32.mrb[0].mxu0
        %v2400 = vpop.f32.mrb[0].mxu0
        %v2401 = vadd.f32 0.0, %v2400
        %v2402 = vpop.f32.mrb[0].mxu0
        %2403 = vmatprep.mubr.bf16.mxu0 0
        %2404 = vmatmul.mubr.bf16.gmra.mrb[0].mxu0 %v2315
        %v2405 = vpop.f32.mrb[0].mxu0
        %v2406 = vadd.f32 0.0, %v2405
        %v2407 = vpop.f32.mrb[0].mxu0
        %v2408 = vpop.f32.mrb[0].mxu0
        %v2409 = vadd.f32 0.0, %v2408
        %v2410 = vpop.f32.mrb[0].mxu0
        %2411 = vmatprep.mubr.bf16.mxu0 0
        %2412 = vmatmul.mubr.bf16.gmra.mrb[0].mxu0 %v2318
        %v2413 = vpop.f32.mrb[0].mxu0
        %v2414 = vadd.f32 0.0, %v2413
        %v2415 = vpop.f32.mrb[0].mxu0
        %v2416 = vpop.f32.mrb[0].mxu0
        %v2417 = vadd.f32 0.0, %v2416
        %v2418 = vpop.f32.mrb[0].mxu0
        %2419 = vdwg.mxu0
        %v2420 = vadd.f32 %v2038, %v2358
        %v2421 = vadd.f32 %v2039, %v2361
        %v2422 = vadd.f32 %v2040, %v2366
        %v2423 = vadd.f32 %v2041, %v2369
        %v2424 = vadd.f32 %v2042, %v2374
        %v2425 = vadd.f32 %v2043, %v2377
        %v2426 = vadd.f32 %v2044, %v2382
        %v2427 = vadd.f32 %v2045, %v2385
        %v2428 = vadd.f32 %v2046, %v2390
        %v2429 = vadd.f32 %v2047, %v2393
        %v2430 = vadd.f32 %v2048, %v2398
        %v2431 = vadd.f32 %v2049, %v2401
        %v2432 = vadd.f32 %v2050, %v2406
        %v2433 = vadd.f32 %v2051, %v2409
        %v2434 = vadd.f32 %v2052, %v2414
        %v2435 = vadd.f32 %v2053, %v2417
        %v2436 = vld [vmem:[%s1855] sm:$0xe]
        %v2437 = vld [vmem:[%s1855 + $0xc] sm:$0xe]
        %v2438 = vld [vmem:[%s1855 + $0x18] sm:$0xe]
        %v2439 = vld [vmem:[%s1855 + $0x24] sm:$0xe]
        %v2440 = vld [vmem:[%s1855 + $0x30] sm:$0xe]
        %v2441 = vld [vmem:[%s1855 + $0x3c] sm:$0xe]
        %v2442 = vld [vmem:[%s1855 + $0x48] sm:$0xe]
        %v2443 = vld [vmem:[%s1855 + $0x54] sm:$0xe]
        %v2468 = vrot.slane %v2436, 5
        %v2469 = vrot.slane %v2468, 4
        %v2470 = vrot.slane %v2055, 5
        %v2471 = vsel %vm791, %v2469, %v2470
        %v2472 = vrot.slane %v2470, 4
        %v2473 = vrot.slane %v2056, 5
        %v2474 = vsel %vm791, %v2472, %v2473
        %v2475 = vrot.slane %v2437, 5
        %v2476 = vrot.slane %v2475, 4
        %v2477 = vrot.slane %v2058, 5
        %v2478 = vsel %vm791, %v2476, %v2477
        %v2479 = vrot.slane %v2477, 4
        %v2480 = vrot.slane %v2059, 5
        %v2481 = vsel %vm791, %v2479, %v2480
        %v2482 = vrot.slane %v2438, 5
        %v2483 = vrot.slane %v2482, 4
        %v2484 = vrot.slane %v2061, 5
        %v2485 = vsel %vm791, %v2483, %v2484
        %v2486 = vrot.slane %v2484, 4
        %v2487 = vrot.slane %v2062, 5
        %v2488 = vsel %vm791, %v2486, %v2487
        %v2489 = vrot.slane %v2439, 5
        %v2490 = vrot.slane %v2489, 4
        %v2491 = vrot.slane %v2064, 5
        %v2492 = vsel %vm791, %v2490, %v2491
        %v2493 = vrot.slane %v2491, 4
        %v2494 = vrot.slane %v2065, 5
        %v2495 = vsel %vm791, %v2493, %v2494
        %v2496 = vrot.slane %v2440, 5
        %v2497 = vrot.slane %v2496, 4
        %v2498 = vrot.slane %v2067, 5
        %v2499 = vsel %vm791, %v2497, %v2498
        %v2500 = vrot.slane %v2498, 4
        %v2501 = vrot.slane %v2068, 5
        %v2502 = vsel %vm791, %v2500, %v2501
        %v2503 = vrot.slane %v2441, 5
        %v2504 = vrot.slane %v2503, 4
        %v2505 = vrot.slane %v2070, 5
        %v2506 = vsel %vm791, %v2504, %v2505
        %v2507 = vrot.slane %v2505, 4
        %v2508 = vrot.slane %v2071, 5
        %v2509 = vsel %vm791, %v2507, %v2508
        %v2510 = vrot.slane %v2442, 5
        %v2511 = vrot.slane %v2510, 4
        %v2512 = vrot.slane %v2073, 5
        %v2513 = vsel %vm791, %v2511, %v2512
        %v2514 = vrot.slane %v2512, 4
        %v2515 = vrot.slane %v2074, 5
        %v2516 = vsel %vm791, %v2514, %v2515
        %v2517 = vrot.slane %v2443, 5
        %v2518 = vrot.slane %v2517, 4
        %v2519 = vrot.slane %v2076, 5
        %v2520 = vsel %vm791, %v2518, %v2519
        %v2521 = vrot.slane %v2519, 4
        %v2522 = vrot.slane %v2077, 5
        %v2523 = vsel %vm791, %v2521, %v2522
        %s2524 = scalar_lea.vmem %s1, 32
        %v2525 = vld [vmem:[%s2524] sm:$0xf]
        %v2526 = vunpack.c.l.b16 %v2471
        %v2527 = vunpack.c.l.b16 %v2474
        %v2528 = vunpack.c.l.b16 %v2478
        %v2529 = vunpack.c.l.b16 %v2481
        %v2530 = vunpack.c.l.b16 %v2485
        %v2531 = vunpack.c.l.b16 %v2488
        %v2532 = vunpack.c.l.b16 %v2492
        %v2533 = vunpack.c.l.b16 %v2495
        %v2534 = vunpack.c.l.b16 %v2499
        %v2535 = vunpack.c.l.b16 %v2502
        %v2536 = vunpack.c.l.b16 %v2506
        %v2537 = vunpack.c.l.b16 %v2509
        %v2538 = vunpack.c.l.b16 %v2513
        %v2539 = vunpack.c.l.b16 %v2516
        %v2540 = vunpack.c.l.b16 %v2520
        %v2541 = vunpack.c.l.b16 %v2523
        %v2542 = vpack.c.b16 %v2527, %v2526
        %v2543 = vpack.c.b16 %v2529, %v2528
        %v2544 = vpack.c.b16 %v2531, %v2530
        %v2545 = vpack.c.b16 %v2533, %v2532
        %v2546 = vpack.c.b16 %v2535, %v2534
        %v2547 = vpack.c.b16 %v2537, %v2536
        %v2548 = vpack.c.b16 %v2539, %v2538
        %v2549 = vpack.c.b16 %v2541, %v2540
        %v2551 = vsel %vm475, %v2542, 0
        %v2554 = vsel %vm475, %v2543, 0
        %v2557 = vsel %vm475, %v2544, 0
        %v2560 = vsel %vm475, %v2545, 0
        %v2563 = vsel %vm475, %v2546, 0
        %v2566 = vsel %vm475, %v2547, 0
        %v2569 = vsel %vm475, %v2548, 0
        %v2572 = vsel %vm475, %v2549, 0
        %v2575 = vsel %vm500, %v2525, 0
        %2577 = vmatprep.subr.bf16.mxu0 0
        %2578 = vmatpush1.bf16.msra.mxu0 %v2575
        %2579 = vmatprep.subr.bf16.mxu0 0
        %2580 = vmatpush1.bf16.msra.mxu0 0
        %2581 = vmatprep.subr.bf16.mxu0 0
        %2582 = vmatpush1.bf16.msra.mxu0 0
        %2583 = vmatprep.subr.bf16.mxu0 0
        %2584 = vmatpush1.bf16.msra.mxu0 0
        %2585 = vmatprep.subr.bf16.mxu0 0
        %2586 = vmatpush1.bf16.msra.mxu0 0
        %2587 = vmatprep.subr.bf16.mxu0 0
        %2588 = vmatpush1.bf16.msra.mxu0 0
        %2589 = vmatprep.subr.bf16.mxu0 0
        %2590 = vmatpush1.bf16.msra.mxu0 0
        %2591 = vmatprep.subr.bf16.mxu0 0
        %2592 = vmatpush1.bf16.msra.mxu0 0
        %2593 = vmatprep.subr.bf16.mxu0 0
        %2594 = vmatpush1.bf16.msra.mxu0 0
        %2595 = vmatprep.subr.bf16.mxu0 0
        %2596 = vmatpush1.bf16.msra.mxu0 0
        %2597 = vmatprep.subr.bf16.mxu0 0
        %2598 = vmatpush1.bf16.msra.mxu0 0
        %2599 = vmatprep.subr.bf16.mxu0 0
        %2600 = vmatpush1.bf16.msra.mxu0 0
        %2601 = vmatprep.subr.bf16.mxu0 0
        %2602 = vmatpush1.bf16.msra.mxu0 0
        %2603 = vmatprep.subr.bf16.mxu0 0
        %2604 = vmatpush1.bf16.msra.mxu0 0
        %2605 = vmatprep.subr.bf16.mxu0 0
        %2606 = vmatpush1.bf16.msra.mxu0 0
        %2607 = vmatprep.subr.bf16.mxu0 0
        %2608 = vmatpush1.bf16.msra.mxu0 0
        %2609 = vmatprep.mubr.bf16.mxu0 0
        %2610 = vmatmul.mubr.bf16.gmra.mrb[0].mxu0 %v2551
        %v2611 = vpop.f32.mrb[0].mxu0
        %v2612 = vadd.f32 0.0, %v2611
        %v2613 = vpop.f32.mrb[0].mxu0
        %v2614 = vpop.f32.mrb[0].mxu0
        %v2615 = vadd.f32 0.0, %v2614
        %v2616 = vpop.f32.mrb[0].mxu0
        %2617 = vmatprep.mubr.bf16.mxu0 0
        %2618 = vmatmul.mubr.bf16.gmra.mrb[0].mxu0 %v2554
        %v2619 = vpop.f32.mrb[0].mxu0
        %v2620 = vadd.f32 0.0, %v2619
        %v2621 = vpop.f32.mrb[0].mxu0
        %v2622 = vpop.f32.mrb[0].mxu0
        %v2623 = vadd.f32 0.0, %v2622
        %v2624 = vpop.f32.mrb[0].mxu0
        %2625 = vmatprep.mubr.bf16.mxu0 0
        %2626 = vmatmul.mubr.bf16.gmra.mrb[0].mxu0 %v2557
        %v2627 = vpop.f32.mrb[0].mxu0
        %v2628 = vadd.f32 0.0, %v2627
        %v2629 = vpop.f32.mrb[0].mxu0
        %v2630 = vpop.f32.mrb[0].mxu0
        %v2631 = vadd.f32 0.0, %v2630
        %v2632 = vpop.f32.mrb[0].mxu0
        %2633 = vmatprep.mubr.bf16.mxu0 0
        %2634 = vmatmul.mubr.bf16.gmra.mrb[0].mxu0 %v2560
        %v2635 = vpop.f32.mrb[0].mxu0
        %v2636 = vadd.f32 0.0, %v2635
        %v2637 = vpop.f32.mrb[0].mxu0
        %v2638 = vpop.f32.mrb[0].mxu0
        %v2639 = vadd.f32 0.0, %v2638
        %v2640 = vpop.f32.mrb[0].mxu0
        %2641 = vmatprep.mubr.bf16.mxu0 0
        %2642 = vmatmul.mubr.bf16.gmra.mrb[0].mxu0 %v2563
        %v2643 = vpop.f32.mrb[0].mxu0
        %v2644 = vadd.f32 0.0, %v2643
        %v2645 = vpop.f32.mrb[0].mxu0
        %v2646 = vpop.f32.mrb[0].mxu0
        %v2647 = vadd.f32 0.0, %v2646
        %v2648 = vpop.f32.mrb[0].mxu0
        %2649 = vmatprep.mubr.bf16.mxu0 0
        %2650 = vmatmul.mubr.bf16.gmra.mrb[0].mxu0 %v2566
        %v2651 = vpop.f32.mrb[0].mxu0
        %v2652 = vadd.f32 0.0, %v2651
        %v2653 = vpop.f32.mrb[0].mxu0
        %v2654 = vpop.f32.mrb[0].mxu0
        %v2655 = vadd.f32 0.0, %v2654
        %v2656 = vpop.f32.mrb[0].mxu0
        %2657 = vmatprep.mubr.bf16.mxu0 0
        %2658 = vmatmul.mubr.bf16.gmra.mrb[0].mxu0 %v2569
        %v2659 = vpop.f32.mrb[0].mxu0
        %v2660 = vadd.f32 0.0, %v2659
        %v2661 = vpop.f32.mrb[0].mxu0
        %v2662 = vpop.f32.mrb[0].mxu0
        %v2663 = vadd.f32 0.0, %v2662
        %v2664 = vpop.f32.mrb[0].mxu0
        %2665 = vmatprep.mubr.bf16.mxu0 0
        %2666 = vmatmul.mubr.bf16.gmra.mrb[0].mxu0 %v2572
        %v2667 = vpop.f32.mrb[0].mxu0
        %v2668 = vadd.f32 0.0, %v2667
        %v2669 = vpop.f32.mrb[0].mxu0
        %v2670 = vpop.f32.mrb[0].mxu0
        %v2671 = vadd.f32 0.0, %v2670
        %v2672 = vpop.f32.mrb[0].mxu0
        %2673 = vdwg.mxu0
        %v2674 = vadd.f32 %v2420, %v2612
        %v2675 = vadd.f32 %v2421, %v2615
        %v2676 = vadd.f32 %v2422, %v2620
        %v2677 = vadd.f32 %v2423, %v2623
        %v2678 = vadd.f32 %v2424, %v2628
        %v2679 = vadd.f32 %v2425, %v2631
        %v2680 = vadd.f32 %v2426, %v2636
        %v2681 = vadd.f32 %v2427, %v2639
        %v2682 = vadd.f32 %v2428, %v2644
        %v2683 = vadd.f32 %v2429, %v2647
        %v2684 = vadd.f32 %v2430, %v2652
        %v2685 = vadd.f32 %v2431, %v2655
        %v2686 = vadd.f32 %v2432, %v2660
        %v2687 = vadd.f32 %v2433, %v2663
        %v2688 = vadd.f32 %v2434, %v2668
        %v2689 = vadd.f32 %v2435, %v2671
        %v2690 = vld [vmem:[%s2] sm:$0x1]
        %v2692 = vlaneseq
        %v2693 = vshrl.u32 %v2692, 7
        %v2694 = vsub.s32 0, %v2693
        %v2695 = vrot.slane %v2690, %v2694
        %v2697 = vadd.f32 %v2674, %v2695
        %v2698 = vadd.f32 %v2675, %v2695
        %v2699 = vadd.f32 %v2676, %v2695
        %v2700 = vadd.f32 %v2677, %v2695
        %v2701 = vadd.f32 %v2678, %v2695
        %v2702 = vadd.f32 %v2679, %v2695
        %v2703 = vadd.f32 %v2680, %v2695
        %v2704 = vadd.f32 %v2681, %v2695
        %v2705 = vadd.f32 %v2682, %v2695
        %v2706 = vadd.f32 %v2683, %v2695
        %v2707 = vadd.f32 %v2684, %v2695
        %v2708 = vadd.f32 %v2685, %v2695
        %v2709 = vadd.f32 %v2686, %v2695
        %v2710 = vadd.f32 %v2687, %v2695
        %v2711 = vadd.f32 %v2688, %v2695
        %v2712 = vadd.f32 %v2689, %v2695
        %v2713 = vmax.f32 %v2697, 0.0
        %v2714 = vmax.f32 %v2698, 0.0
        %v2715 = vmax.f32 %v2699, 0.0
        %v2716 = vmax.f32 %v2700, 0.0
        %v2717 = vmax.f32 %v2701, 0.0
        %v2718 = vmax.f32 %v2702, 0.0
        %v2719 = vmax.f32 %v2703, 0.0
        %v2720 = vmax.f32 %v2704, 0.0
        %v2721 = vmax.f32 %v2705, 0.0
        %v2722 = vmax.f32 %v2706, 0.0
        %v2723 = vmax.f32 %v2707, 0.0
        %v2724 = vmax.f32 %v2708, 0.0
        %v2725 = vmax.f32 %v2709, 0.0
        %v2726 = vmax.f32 %v2710, 0.0
        %v2727 = vmax.f32 %v2711, 0.0
        %v2728 = vmax.f32 %v2712, 0.0
        %2729 = vst [vmem:[%s210] sm:$0xff] %v2713
        %2730 = vst [vmem:[%s210 + $0x8] sm:$0xff] %v2714
        %2731 = vst [vmem:[%s210 + $0x10] sm:$0xff] %v2715
        %2732 = vst [vmem:[%s210 + $0x18] sm:$0xff] %v2716
        %2733 = vst [vmem:[%s210 + $0x20] sm:$0xff] %v2717
        %2734 = vst [vmem:[%s210 + $0x28] sm:$0xff] %v2718
        %2735 = vst [vmem:[%s210 + $0x30] sm:$0xff] %v2719
        %2736 = vst [vmem:[%s210 + $0x38] sm:$0xff] %v2720
        %2737 = vst [vmem:[%s210 + $0x40] sm:$0xff] %v2721
        %2738 = vst [vmem:[%s210 + $0x48] sm:$0xff] %v2722
        %2739 = vst [vmem:[%s210 + $0x50] sm:$0xff] %v2723
        %2740 = vst [vmem:[%s210 + $0x58] sm:$0xff] %v2724
        %2741 = vst [vmem:[%s210 + $0x60] sm:$0xff] %v2725
        %2742 = vst [vmem:[%s210 + $0x68] sm:$0xff] %v2726
        %2743 = vst [vmem:[%s210 + $0x70] sm:$0xff] %v2727
        %2744 = vst [vmem:[%s210 + $0x78] sm:$0xff] %v2728
        %v2745 = vadd.f32 %v2713, %v2714
        %v2746 = vadd.f32 %v2745, %v2715
        %v2747 = vadd.f32 %v2746, %v2716
        %v2748 = vadd.f32 %v2747, %v2717
        %v2749 = vadd.f32 %v2748, %v2718
        %v2750 = vadd.f32 %v2749, %v2719
        %v2751 = vadd.f32 %v2750, %v2720
        %v2752 = vadd.f32 %v2751, %v2721
        %v2753 = vadd.f32 %v2752, %v2722
        %v2754 = vadd.f32 %v2753, %v2723
        %v2755 = vadd.f32 %v2754, %v2724
        %v2756 = vadd.f32 %v2755, %v2725
        %v2757 = vadd.f32 %v2756, %v2726
        %v2758 = vadd.f32 %v2757, %v2727
        %v2759 = vadd.f32 %v2758, %v2728
        %v2760 = vrot.slane %v2759, 4
        %v2761 = vadd.f32 %v2759, %v2760
        %v2762 = vrot.slane %v2761, 2
        %v2763 = vadd.f32 %v2761, %v2762
        %v2764 = vrot.slane %v2763, 1
        %v2765 = vadd.f32 %v2763, %v2764
        %2766 = vst [vmem:[%s217] sm:$0x1] %v2765
        %v2767 = vmul.f32 %v2713, %v2713
        %v2768 = vmul.f32 %v2714, %v2714
        %v2769 = vmul.f32 %v2715, %v2715
        %v2770 = vmul.f32 %v2716, %v2716
        %v2771 = vmul.f32 %v2717, %v2717
        %v2772 = vmul.f32 %v2718, %v2718
        %v2773 = vmul.f32 %v2719, %v2719
        %v2774 = vmul.f32 %v2720, %v2720
        %v2775 = vmul.f32 %v2721, %v2721
        %v2776 = vmul.f32 %v2722, %v2722
        %v2777 = vmul.f32 %v2723, %v2723
        %v2778 = vmul.f32 %v2724, %v2724
        %v2779 = vmul.f32 %v2725, %v2725
        %v2780 = vmul.f32 %v2726, %v2726
        %v2781 = vmul.f32 %v2727, %v2727
        %v2782 = vmul.f32 %v2728, %v2728
        %v2783 = vadd.f32 %v2767, %v2768
        %v2784 = vadd.f32 %v2783, %v2769
        %v2785 = vadd.f32 %v2784, %v2770
        %v2786 = vadd.f32 %v2785, %v2771
        %v2787 = vadd.f32 %v2786, %v2772
        %v2788 = vadd.f32 %v2787, %v2773
        %v2789 = vadd.f32 %v2788, %v2774
        %v2790 = vadd.f32 %v2789, %v2775
        %v2791 = vadd.f32 %v2790, %v2776
        %v2792 = vadd.f32 %v2791, %v2777
        %v2793 = vadd.f32 %v2792, %v2778
        %v2794 = vadd.f32 %v2793, %v2779
        %v2795 = vadd.f32 %v2794, %v2780
        %v2796 = vadd.f32 %v2795, %v2781
        %v2797 = vadd.f32 %v2796, %v2782
        %v2798 = vrot.slane %v2797, 4
        %v2799 = vadd.f32 %v2797, %v2798
        %v2800 = vrot.slane %v2799, 2
        %v2801 = vadd.f32 %v2799, %v2800
        %v2802 = vrot.slane %v2801, 1
        %v2803 = vadd.f32 %v2801, %v2802
        %2804 = vst [vmem:[%s217 + $0x1] sm:$0x1] %v2803
        %s2805 = sand.u32 %s112, 1
        %s2806 = scalar_lea.sflag [#allocation3], %s2805
        %s2807 = sand.u32 %s112, 1
        %s2808 = smul.addr %s2807, 128
        %s2809 = scalar_lea.vmem [#allocation2], %s2808
        %s2810 = sand.u32 %s140, 1
        %s2811 = scalar_lea.sflag [#allocation5], %s2810
        %s2812 = sand.u32 %s140, 1
        %s2813 = smul.addr %s2812, 2
        %s2814 = scalar_lea.vmem [#allocation4], %s2813
        // Predicated region
        $region33: #{tpu_custom_call.1} parent=31 // pred_check
          %p2815 = pneg %p122
        $region34: #{tpu_custom_call.1} parent=31 // pred_check_branch
          %2817 = sbr.rel (%p2815) target = $region36
        $region35: #{tpu_custom_call.1} parent=31 // pred_region
          %s2818 = smul.u32 16, %s27
          %s2820 = ssub.s32 2048, 2048
          %2821 = vsyncadd %s2806, %s2820
          %s2822 = smul.addr %s26, 32
          %s2823 = sadd.s32 %s2818, %s2822
          %s2824 = smul.addr %s2823, 128
          %s2825 = scalar_lea.hbm %s3, %s2824
          %s2826 = sshll.u32 %s2809, 4
          %s2827 = int_to_ptr.vmem [resolvable:$true] %s2826
          %2832 = dma.vmem_to_hbm [thread:$0]  %s2827, 2048, %s2825, %s2806, 128, 128, 8
        $region36: #{tpu_custom_call.1} parent=31 // pred_fallthru
          _
        // Predicated region
        $region37: #{tpu_custom_call.1} parent=31 // pred_check
          %p2833 = pneg %p150
        $region38: #{tpu_custom_call.1} parent=31 // pred_check_branch
          %2835 = sbr.rel (%p2833) target = $region40
        $region39: #{tpu_custom_call.1} parent=31 // pred_region
          %s2837 = ssub.s32 32, 32
          %2838 = vsyncadd %s2811, %s2837
          %s2839 = smul.addr %s26, 2
          %s2840 = sadd.s32 %s27, %s2839
          %s2841 = smul.addr %s2840, 32
          %s2842 = scalar_lea.hbm %s4, %s2841
          %s2844 = sshll.u32 %s2814, 4
          %s2845 = int_to_ptr.vmem [resolvable:$true] %s2844
          %2847 = dma.vmem_to_hbm [thread:$0]  %s2845, 32, %s2842, %s2811
        $region40: #{tpu_custom_call.1} parent=31 // pred_fallthru
          _
      $region32: #{tpu_custom_call.1} parent=5 // pred_fallthru
        _
      %p2848 = scmp.le.s32.totalorder 2, %s17
      // Predicated region
      $region41: #{tpu_custom_call.1} parent=5 // pred_check
        %p2849 = pneg %p2848
      $region42: #{tpu_custom_call.1} parent=5 // pred_check_branch
        %2851 = sbr.rel (%p2849) target = $region44
      $region43: #{tpu_custom_call.1} parent=5 // pred_region
        %s2852 = ssub.s32 %s17, 2
        // Predicated region
        $region45: #{tpu_custom_call.1} parent=43 // pred_check
          %p2853 = pneg %p128
        $region46: #{tpu_custom_call.1} parent=43 // pred_check_branch
          %2855 = sbr.rel (%p2853) target = $region48
        $region47: #{tpu_custom_call.1} parent=43 // pred_region
          %s2856 = sand.u32 %s113, 1
          %s2857 = scalar_lea.sflag [#allocation3], %s2856
          %s2858 = sand.u32 %s113, 1
          %s2859 = smul.addr %s2858, 128
          %s2860 = scalar_lea.vmem [#allocation2], %s2859
          %2861 = dma.done %s2857, 2048
        $region48: #{tpu_custom_call.1} parent=43 // pred_fallthru
          _
        // Predicated region
        $region49: #{tpu_custom_call.1} parent=43 // pred_check
          %p2862 = pneg %p156
        $region50: #{tpu_custom_call.1} parent=43 // pred_check_branch
          %2864 = sbr.rel (%p2862) target = $region52
        $region51: #{tpu_custom_call.1} parent=43 // pred_region
          %s2865 = sand.u32 %s141, 1
          %s2866 = scalar_lea.sflag [#allocation5], %s2865
          %s2867 = sand.u32 %s141, 1
          %s2868 = smul.addr %s2867, 2
          %s2869 = scalar_lea.vmem [#allocation4], %s2868
          %2870 = dma.done %s2866, 32
        $region52: #{tpu_custom_call.1} parent=43 // pred_fallthru
          _
      $region44: #{tpu_custom_call.1} parent=5 // pred_fallthru
        _
    $region6: #{tpu_custom_call.1} parent=1 // loop_footer
      %s21 = sadd.s32 1, %s17
    $region7: #{tpu_custom_call.1} parent=1 // loop_footer_branch
      %16 = sbr.rel target = $region3
    $region8: #{tpu_custom_call.1} parent=1 // loop_exit
      _
    %2871 = vsyncpa [#allocation3], 1
    %s2872 = scalar_lea.sflag [#allocation3], 1
    %2873 = vsyncpa %s2872, 1
    %2874 = vsyncpa [#allocation5], 1
    %s2875 = scalar_lea.sflag [#allocation5], 1
    %2876 = vsyncpa %s2875, 1

</llo_original>
